<compile_context>
chip_gen: v7x
topology: tpu7x:2x2x1
jax: 0.10.0
libtpu: 0.0.40
codegen_flags: <defaults>
</compile_context>

<pallas_src>
import jax
import jax.numpy as jnp
from jax.experimental import pallas as pl
from jax.experimental.pallas import tpu as pltpu

SIGMA = 30.0
NEG_INF = -1e30


# ----------------------------------------------------------------------------
# Device-aware tiling configuration
# ----------------------------------------------------------------------------
def _device_config():
    """Returns (dst-row tile base, vmem_limit_bytes, is_v5e)."""
    try:
        kind = jax.devices()[0].device_kind.lower()
    except Exception:
        kind = ""
    if "v6" in kind:                       # v6e: 128 MiB VMEM, 2x256 MXU
        return 256, 96 * 1024 * 1024, False
    is_v5 = "v5" in kind
    # v5e (4x128 MXU, 1 vst slot) and v7x (64 MiB VMEM) / unknown: conservative.
    return 128, 48 * 1024 * 1024, is_v5


# ----------------------------------------------------------------------------
# Prep kernel (single step): edge weights + node projections + GAT src scores
# ----------------------------------------------------------------------------
def _prep_kernel(noise_ref, dist2_ref, xcat_ref, fc1_wt_ref, slab10_ref,
                 wbd_ref, slabH_ref, wm_ref, hl_ref, hg_ref, asrc_ref):
    f32 = jnp.float32
    H = slabH_ref.shape[1]

    fc1_b = slab10_ref[0:1, :]               # (1, 10)
    fc2_w = slab10_ref[1:2, :]               # (1, 10)
    fc2_b = slab10_ref[2:3, 0:1]             # (1, 1)
    att_src = slabH_ref[0:1, :]              # (1, H)

    # ---- EdgeWeightLayer + gaussian distance kernel + smooth_mapping + filter
    h = jnp.dot(noise_ref[...], fc1_wt_ref[...],
                preferred_element_type=f32) + fc1_b                       # (E, 10)
    h = jnp.where(h > 0, h, jnp.exp(jnp.minimum(h, 0.0)) - 1.0)           # safe ELU
    noise_ind = jax.lax.dot_general(fc2_w, h, (((1,), (1,)), ((), ())),
                                    preferred_element_type=f32) + fc2_b   # (1, E)
    gw = jnp.exp(dist2_ref[...] * (-1.0 / (2.0 * SIGMA * SIGMA)))         # (1, E)
    z = gw * (1.0 + noise_ind)
    w = 0.1 + 1.9 * jax.nn.sigmoid(z - 1.0)                               # smooth_mapping
    wm_ref[...] = jnp.where(w >= 0.2, w, 0.0)                             # dynamic filter

    # ---- merged branch projections [x_l | x_g] @ blockdiag(Wl^T, Wg^T), once
    hb = jnp.dot(xcat_ref[...], wbd_ref[...],
                 preferred_element_type=f32)                              # (n_pad, 2H)
    hl = hb[:, :H]
    hg = hb[:, H:]
    hl_ref[...] = hl
    hg_ref[...] = hg

    # ---- grid-invariant GAT source attention scores
    asrc_ref[...] = jax.lax.dot_general(att_src, hl, (((1,), (1,)), ((), ())),
                                        preferred_element_type=f32)       # (1, n_pad)


def _prep_pallas(noise_feats, dist2, x_cat, params):
    E = noise_feats.shape[0]
    n_pad, f_cat = x_cat.shape
    H = params["slabH"].shape[1]
    full = lambda i: (0, 0)
    return pl.pallas_call(
        _prep_kernel,
        out_shape=(jax.ShapeDtypeStruct((1, E), jnp.float32),
                   jax.ShapeDtypeStruct((n_pad, H), jnp.float32),
                   jax.ShapeDtypeStruct((n_pad, H), jnp.float32),
                   jax.ShapeDtypeStruct((1, n_pad), jnp.float32)),
        grid=(1,),
        in_specs=[
            pl.BlockSpec((E, 10), full),
            pl.BlockSpec((1, E), full),
            pl.BlockSpec((n_pad, f_cat), full),
            pl.BlockSpec(params["fc1_wt"].shape, full),
            pl.BlockSpec(params["slab10"].shape, full),
            pl.BlockSpec(params["w_bd"].shape, full),
            pl.BlockSpec(params["slabH"].shape, full),
        ],
        out_specs=(pl.BlockSpec((1, E), full),
                   pl.BlockSpec((n_pad, H), full),
                   pl.BlockSpec((n_pad, H), full),
                   pl.BlockSpec((1, n_pad), full)),
        compiler_params=pltpu.CompilerParams(
            dimension_semantics=("arbitrary",)),
    )(noise_feats, dist2, x_cat, params["fc1_wt"], params["slab10"],
      params["w_bd"], params["slabH"])


# ----------------------------------------------------------------------------
# Main kernel: per dst-row tile, streamed adjacency row tile
# ----------------------------------------------------------------------------
def _main_kernel(adj_ref, hl_ref, hg_ref, asrc_ref, deg_ref, slabH_ref,
                 wf1t_ref, out_ref):
    f32 = jnp.float32
    bf16 = jnp.bfloat16
    i = pl.program_id(0)
    tile_n = out_ref.shape[1]
    H = slabH_ref.shape[1]
    row0 = pl.multiple_of(i * tile_n, 128)

    att_dst = slabH_ref[1:2, :]              # (1, H)
    bl = slabH_ref[2:3, :]                   # (1, H)
    bg = slabH_ref[3:4, :]                   # (1, H)
    bf1 = slabH_ref[4:5, :]                  # (1, H)
    wf2 = slabH_ref[5:6, :]                  # (1, H)
    bf2 = slabH_ref[6:7, 0:1]                # (1, 1)

    adj = adj_ref[...]                       # (tile_n, n_pad) streamed row tile
    # surviving edges have w >= 0.2 and self loops weight 1.0 -> mask is adj > 0
    mask = adj > 0.0

    # ---- global branch first (adj / a_norm die before the softmax block) -----
    deg_dst = jnp.sum(adj, axis=1, keepdims=True)                   # in-deg + self loop
    a_norm = (jax.lax.rsqrt(deg_dst) * adj) * jax.lax.rsqrt(deg_ref[...])
    x_g = jnp.dot(a_norm.astype(bf16), hg_ref[...].astype(bf16),
                  preferred_element_type=f32) + bg                  # (tile_n, H)
    x_g = jnp.maximum(x_g, 0.0)                                     # F.relu

    # ---- local branch: single-head GATConv with masked row softmax -----------
    # TODO(synk): PyG GATConv with edge_dim=None ignores the passed edge weight
    # e_w (only the filtered edge set is used); mirrored here.
    hl_t = hl_ref[pl.ds(row0, tile_n), :]                           # dst rows, no DMA
    a_dst = jnp.sum(hl_t * att_dst, axis=1, keepdims=True)          # (tile_n, 1)
    logits = a_dst + asrc_ref[...]                                  # (tile_n, n_pad)
    logits = jnp.where(logits > 0, logits, 0.2 * logits)            # LeakyReLU(0.2)
    logits = jnp.where(mask, logits, NEG_INF)
    logits = logits - jnp.max(logits, axis=1, keepdims=True)
    p = jnp.where(mask, jnp.exp(logits), 0.0)
    inv_den = pl.reciprocal(jnp.sum(p, axis=1, keepdims=True), approx=True)
    alpha = p * inv_den                                             # row softmax
    x_l = jnp.dot(alpha.astype(bf16), hl_ref[...].astype(bf16),
                  preferred_element_type=f32) + bl                  # (tile_n, H)
    x_l = jnp.where(x_l > 0, x_l, jnp.exp(jnp.minimum(x_l, 0.0)) - 1.0)   # F.elu

    # ---- fusion: cat -> one K=2H matmul -> ReLU -> Dropout(id) -> Linear -----
    xf = jnp.concatenate([x_l, x_g], axis=1)                        # (tile_n, 2H)
    hf = jnp.dot(xf, wf1t_ref[...], preferred_element_type=f32) + bf1
    hf = jnp.maximum(hf, 0.0)
    out_ref[...] = jax.lax.dot_general(wf2, hf, (((1,), (1,)), ((), ())),
                                       preferred_element_type=f32) + bf2  # (1, tile_n)


def _main_pallas(adj, hl, hg, a_src, deg, params, tile_n, vmem_cap, is_v5e):
    n_pad = adj.shape[0]
    H = hl.shape[1]
    grid_steps = n_pad // tile_n
    full = lambda i: (0, 0)

    # v5e only: deeper buffering on the single sizable streamed input.
    if is_v5e and grid_steps >= 3:
        adj_spec = pl.BlockSpec((tile_n, n_pad), lambda i: (i, 0),
                                pipeline_mode=pl.Buffered(3))
    else:
        adj_spec = pl.BlockSpec((tile_n, n_pad), lambda i: (i, 0))

    cost = pl.CostEstimate(
        flops=int(4 * n_pad * n_pad * H + 4 * n_pad * H * H + 2 * n_pad * H),
        transcendentals=int(n_pad * n_pad),
        bytes_accessed=int(4 * (n_pad * n_pad + 2 * n_pad * H + 3 * n_pad)),
    )

    return pl.pallas_call(
        _main_kernel,
        out_shape=jax.ShapeDtypeStruct((1, n_pad), jnp.float32),
        grid=(grid_steps,),
        in_specs=[
            adj_spec,                                       # streamed dst-row tile
            pl.BlockSpec((n_pad, H), full),                 # hl (resident)
            pl.BlockSpec((n_pad, H), full),                 # hg (resident)
            pl.BlockSpec((1, n_pad), full),                 # a_src
            pl.BlockSpec((1, n_pad), full),                 # degrees
            pl.BlockSpec(params["slabH"].shape, full),
            pl.BlockSpec(params["wf1_t"].shape, full),
        ],
        out_specs=pl.BlockSpec((1, tile_n), lambda i: (0, i)),   # lane-dense output
        compiler_params=pltpu.CompilerParams(
            dimension_semantics=("parallel",),              # shard tiles across TCs
            vmem_limit_bytes=vmem_cap),
        cost_estimate=cost,
    )(adj, hl, hg, a_src, deg, params["slabH"], params["wf1_t"])


# ----------------------------------------------------------------------------
# Parameters (deterministic, in-script — shapes from the module __init__)
# ----------------------------------------------------------------------------
def init_params(key, in_local, in_global, hidden):
    ks = jax.random.split(key, 10)
    f32 = jnp.float32

    # EdgeWeightLayer
    fc1_w = jnp.eye(10, dtype=f32)                                   # nn.init.eye_
    fc1_b = 0.1 * jax.random.normal(ks[0], (10,), f32)
    fc2_w = jnp.array([1.0, 0.7, 0.5, 0.3, -0.5, -0.8, -0.3, -0.5, 0.2, -0.2], f32)
    fc2_b = jnp.zeros((), f32)

    # GATConv(in_local, hidden), heads=1
    wl = 0.2 * jax.random.normal(ks[1], (hidden, in_local), f32)     # (out, in)
    att_src = 0.2 * jax.random.normal(ks[2], (hidden,), f32)
    att_dst = 0.2 * jax.random.normal(ks[3], (hidden,), f32)
    bl = 0.1 * jax.random.normal(ks[4], (hidden,), f32)

    # GCNConv(in_global, hidden)
    wg = 0.2 * jax.random.normal(ks[5], (hidden, in_global), f32)
    bg = 0.1 * jax.random.normal(ks[6], (hidden,), f32)

    # fusion: Linear(2*hidden, hidden) -> Linear(hidden, 1)
    wf1 = 0.2 * jax.random.normal(ks[7], (hidden, 2 * hidden), f32)
    bf1 = 0.1 * jax.random.normal(ks[8], (hidden,), f32)
    wf2 = 0.2 * jax.random.normal(ks[9], (hidden,), f32)
    bf2 = jnp.zeros((), f32)

    # ---- packed slabs (fewer kernel inputs / DMA descriptors) ----
    slab10 = jnp.zeros((3, 10), f32)
    slab10 = slab10.at[0].set(fc1_b).at[1].set(fc2_w).at[2, 0].set(fc2_b)

    slabH = jnp.zeros((7, hidden), f32)
    slabH = (slabH.at[0].set(att_src).at[1].set(att_dst).at[2].set(bl)
                  .at[3].set(bg).at[4].set(bf1).at[5].set(wf2).at[6, 0].set(bf2))

    # block-diagonal merged projection [x_l | x_g] @ blockdiag(Wl^T, Wg^T)
    w_bd = jnp.zeros((in_local + in_global, 2 * hidden), f32)
    w_bd = w_bd.at[:in_local, :hidden].set(wl.T).at[in_local:, hidden:].set(wg.T)

    return {
        "fc1_wt": fc1_w.T,        # (10, 10)
        "slab10": slab10,         # (3, 10)  [fc1_b; fc2_w; fc2_b]
        "w_bd": w_bd,             # (in_l + in_g, 2H)
        "slabH": slabH,           # (7, H)   [att_src; att_dst; bl; bg; bf1; wf2; bf2]
        "wf1_t": wf1.T,           # (2H, H)
    }


# ----------------------------------------------------------------------------
# Forward pass (glue = gathers + O(E) adjacency scatter; compute in Pallas)
# ----------------------------------------------------------------------------
def dual_branch_gnn_forward(params, x_local, x_global, coord,
                            noise_features, edge_index):
    N = x_local.shape[0]
    src, dst = edge_index[0], edge_index[1]

    # per-edge inputs (edge axis lane-dense)
    noise_feats = noise_features[src].astype(jnp.float32)              # (E, 10)
    diff = (coord[src] - coord[dst]).astype(jnp.float32)
    dist2 = jnp.sum(diff * diff, axis=1)[None, :]                      # (1, E)

    tile_base, vmem_cap, is_v5e = _device_config()

    # n_pad / tile_n: always multiples of 128 (lane-dense output); budget clamp.
    n128 = ((N + 127) // 128) * 128
    if N <= tile_base:
        tile_n = n128
        n_pad = n128
    else:
        # ~10 live (tile_n, n_pad) f32 buffers per step (streamed adj + mask +
        # logits + softmax + a_norm + double-buffering headroom)
        by_budget = max(128, (vmem_cap // (10 * 4 * n128)) // 128 * 128)
        tile_n = min(tile_base, by_budget)
        n_pad = ((N + tile_n - 1) // tile_n) * tile_n

    x_cat = jnp.concatenate([x_local, x_global], axis=1).astype(jnp.float32)
    x_cat = jnp.pad(x_cat, ((0, n_pad - N), (0, 0)))    # isolated padded nodes

    # ---- one-shot prep kernel: w_m, hl, hg, a_src (all grid-invariant) ----
    w_m, hl, hg, a_src = _prep_pallas(noise_feats, dist2, x_cat, params)

    # ---- dense weighted adjacency via O(E) XLA scatter + unit self loops ----
    adj = jnp.zeros((n_pad, n_pad), jnp.float32).at[
        dst.astype(jnp.int32), src.astype(jnp.int32)].add(w_m[0])
    adj = adj + jnp.eye(n_pad, dtype=jnp.float32)
    deg = jnp.sum(adj, axis=1)[None, :]                              # (1, n_pad)

    # ---- fused main kernel over streamed dst-row tiles ----
    out = _main_pallas(adj, hl, hg, a_src, deg, params,
                       tile_n, vmem_cap, is_v5e)                     # (1, n_pad)
    return out[0, :N]                                                # .view(-1)


# ----------------------------------------------------------------------------
# Demo
# ----------------------------------------------------------------------------
if __name__ == "__main__":
    N, E = 16, 32
    in_local, in_global, hidden = 8, 6, 32

    key = jax.random.PRNGKey(0)
    k_p, k_e, k_xl, k_xg, k_c, k_nf = jax.random.split(key, 6)

    params = init_params(k_p, in_local, in_global, hidden)

    # random simple directed edges (no self loops, no duplicates)
    flat = jax.random.permutation(k_e, N * (N - 1))[:E]
    src = flat // (N - 1)
    rem = flat % (N - 1)
    dst = jnp.where(rem >= src, rem + 1, rem)
    edge_index = jnp.stack([src, dst]).astype(jnp.int32)               # (2, E)

    x_local = jax.random.normal(k_xl, (N, in_local), jnp.float32)
    x_global = jax.random.normal(k_xg, (N, in_global), jnp.float32)
    coord = 50.0 * jax.random.uniform(k_c, (N, 2), jnp.float32)
    noise_features = jax.random.normal(k_nf, (N, 10), jnp.float32)

    fwd = jax.jit(dual_branch_gnn_forward)
    out = fwd(params, x_local, x_global, coord, noise_features, edge_index)
    jax.block_until_ready(out)
    assert out.shape == (N,)
    print("KERNEL_OK")
</pallas_src>

<mosaic_0001>
module attributes {stable_mosaic.version = 11 : i64} {
  func.func private @main(%arg0: i32) attributes {dimension_semantics = [#tpu.dimension_semantics<core_parallel>], iteration_bounds = array<i64: 2>, tpu.core_type = #tpu.core_type<sc_scalar_subcore>, window_params = []} {
    return
  }
}

module attributes {stable_mosaic.version = 11 : i64} {
  func.func private @main(%arg0: i32) attributes {dimension_semantics = [#tpu.dimension_semantics<core_parallel>], iteration_bounds = array<i64: 2>, tpu.core_type = #tpu.core_type<sc_scalar_subcore>, window_params = []} {
    return
  }
}

module attributes {stable_mosaic.version = 11 : i64} {
  func.func @_prep_kernel(%arg0: i32, %arg1: memref<32x10xf32, #tpu.memory_space<vmem>>, %arg2: memref<1x32xf32, #tpu.memory_space<vmem>>, %arg3: memref<128x14xf32, #tpu.memory_space<vmem>>, %arg4: memref<10x10xf32, #tpu.memory_space<vmem>>, %arg5: memref<3x10xf32, #tpu.memory_space<vmem>>, %arg6: memref<14x64xf32, #tpu.memory_space<vmem>>, %arg7: memref<7x32xf32, #tpu.memory_space<vmem>>, %arg8: memref<1x32xf32, #tpu.memory_space<vmem>>, %arg9: memref<128x32xf32, #tpu.memory_space<vmem>>, %arg10: memref<128x32xf32, #tpu.memory_space<vmem>>, %arg11: memref<1x128xf32, #tpu.memory_space<vmem>>) attributes {dimension_semantics = [#tpu.dimension_semantics<arbitrary>], iteration_bounds = array<i64: 1>, scalar_prefetch = 0 : i64, scratch_operands = 0 : i64, tpu.core_type = #tpu.core_type<tc>, window_params = [{pipeline_mode = #tpu.pipeline_mode<synchronous>, transform_indices = @transform_0, window_bounds = array<i64: 32, 10>}, {pipeline_mode = #tpu.pipeline_mode<synchronous>, transform_indices = @transform_1, window_bounds = array<i64: 1, 32>}, {pipeline_mode = #tpu.pipeline_mode<synchronous>, transform_indices = @transform_2, window_bounds = array<i64: 128, 14>}, {pipeline_mode = #tpu.pipeline_mode<synchronous>, transform_indices = @transform_3, window_bounds = array<i64: 10, 10>}, {pipeline_mode = #tpu.pipeline_mode<synchronous>, transform_indices = @transform_4, window_bounds = array<i64: 3, 10>}, {pipeline_mode = #tpu.pipeline_mode<synchronous>, transform_indices = @transform_5, window_bounds = array<i64: 14, 64>}, {pipeline_mode = #tpu.pipeline_mode<synchronous>, transform_indices = @transform_6, window_bounds = array<i64: 7, 32>}, {pipeline_mode = #tpu.pipeline_mode<synchronous>, transform_indices = @transform_7, window_bounds = array<i64: 1, 32>}, {pipeline_mode = #tpu.pipeline_mode<synchronous>, transform_indices = @transform_8, window_bounds = array<i64: 128, 32>}, {pipeline_mode = #tpu.pipeline_mode<synchronous>, transform_indices = @transform_9, window_bounds = array<i64: 128, 32>}, {pipeline_mode = #tpu.pipeline_mode<synchronous>, transform_indices = @transform_10, window_bounds = array<i64: 1, 128>}]} {
    %c0 = arith.constant 0 : index
    %c0_0 = arith.constant 0 : index
    %0 = vector.load %arg5[%c0, %c0_0] : memref<3x10xf32, #tpu.memory_space<vmem>>, vector<1x10xf32>
    %c1 = arith.constant 1 : index
    %c0_1 = arith.constant 0 : index
    %1 = vector.load %arg5[%c1, %c0_1] : memref<3x10xf32, #tpu.memory_space<vmem>>, vector<1x10xf32>
    %c2 = arith.constant 2 : index
    %c0_2 = arith.constant 0 : index
    %2 = vector.load %arg5[%c2, %c0_2] : memref<3x10xf32, #tpu.memory_space<vmem>>, vector<1x1xf32>
    %c0_3 = arith.constant 0 : index
    %c0_4 = arith.constant 0 : index
    %3 = vector.load %arg7[%c0_3, %c0_4] : memref<7x32xf32, #tpu.memory_space<vmem>>, vector<1x32xf32>
    %c0_5 = arith.constant 0 : index
    %c0_6 = arith.constant 0 : index
    %4 = vector.load %arg1[%c0_5, %c0_6] : memref<32x10xf32, #tpu.memory_space<vmem>>, vector<32x10xf32>
    %c0_7 = arith.constant 0 : index
    %c0_8 = arith.constant 0 : index
    %5 = vector.load %arg4[%c0_7, %c0_8] : memref<10x10xf32, #tpu.memory_space<vmem>>, vector<10x10xf32>
    %cst = arith.constant dense<0.000000e+00> : vector<32x10xf32>
    %6 = tpu.matmul %4, %5, %cst {dimension_numbers = #tpu.dot_dimension_numbers<[1], [0], [0], [1], [0, 0, 1, 1], [], []>} : vector<32x10xf32>, vector<10x10xf32>, vector<32x10xf32> -> vector<32x10xf32>
    %7 = vector.broadcast %0 : vector<1x10xf32> to vector<32x10xf32>
    %8 = arith.addf %6, %7 : vector<32x10xf32>
    %cst_9 = arith.constant 0.000000e+00 : f32
    %9 = vector.broadcast %cst_9 : f32 to vector<32x10xf32>
    %10 = arith.cmpf ogt, %8, %9 : vector<32x10xf32>
    %cst_10 = arith.constant 0.000000e+00 : f32
    %11 = vector.broadcast %cst_10 : f32 to vector<32x10xf32>
    %12 = arith.minimumf %8, %11 : vector<32x10xf32>
    %13 = math.exp %12 : vector<32x10xf32>
    %cst_11 = arith.constant 1.000000e+00 : f32
    %14 = vector.broadcast %cst_11 : f32 to vector<32x10xf32>
    %15 = arith.subf %13, %14 : vector<32x10xf32>
    %16 = arith.select %10, %8, %15 : vector<32x10xi1>, vector<32x10xf32>
    %cst_12 = arith.constant dense<0.000000e+00> : vector<1x32xf32>
    %17 = tpu.matmul %1, %16, %cst_12 {dimension_numbers = #tpu.dot_dimension_numbers<[1], [1], [0], [0], [0, 0, 1, 0], [], []>} : vector<1x10xf32>, vector<32x10xf32>, vector<1x32xf32> -> vector<1x32xf32>
    %18 = vector.broadcast %2 : vector<1x1xf32> to vector<1x32xf32>
    %19 = arith.addf %17, %18 : vector<1x32xf32>
    %c0_13 = arith.constant 0 : index
    %c0_14 = arith.constant 0 : index
    %20 = vector.load %arg2[%c0_13, %c0_14] : memref<1x32xf32, #tpu.memory_space<vmem>>, vector<1x32xf32>
    %cst_15 = arith.constant -5.55555569E-4 : f32
    %21 = vector.broadcast %cst_15 : f32 to vector<1x32xf32>
    %22 = arith.mulf %20, %21 : vector<1x32xf32>
    %23 = math.exp %22 : vector<1x32xf32>
    %cst_16 = arith.constant 1.000000e+00 : f32
    %24 = vector.broadcast %cst_16 : f32 to vector<1x32xf32>
    %25 = arith.addf %24, %19 : vector<1x32xf32>
    %26 = arith.mulf %23, %25 : vector<1x32xf32>
    %cst_17 = arith.constant 1.000000e+00 : f32
    %27 = vector.broadcast %cst_17 : f32 to vector<1x32xf32>
    %28 = arith.subf %26, %27 : vector<1x32xf32>
    %29 = arith.negf %28 : vector<1x32xf32>
    %30 = math.exp %29 : vector<1x32xf32>
    %cst_18 = arith.constant 1.000000e+00 : f32
    %31 = vector.broadcast %cst_18 : f32 to vector<1x32xf32>
    %32 = arith.addf %31, %30 : vector<1x32xf32>
    %33 = arith.divf %31, %32 : vector<1x32xf32>
    %cst_19 = arith.constant 1.900000e+00 : f32
    %34 = vector.broadcast %cst_19 : f32 to vector<1x32xf32>
    %35 = arith.mulf %34, %33 : vector<1x32xf32>
    %cst_20 = arith.constant 1.000000e-01 : f32
    %36 = vector.broadcast %cst_20 : f32 to vector<1x32xf32>
    %37 = arith.addf %36, %35 : vector<1x32xf32>
    %cst_21 = arith.constant 2.000000e-01 : f32
    %38 = vector.broadcast %cst_21 : f32 to vector<1x32xf32>
    %39 = arith.cmpf oge, %37, %38 : vector<1x32xf32>
    %cst_22 = arith.constant 0.000000e+00 : f32
    %40 = vector.broadcast %cst_22 : f32 to vector<1x32xf32>
    %41 = arith.select %39, %37, %40 : vector<1x32xi1>, vector<1x32xf32>
    %c0_23 = arith.constant 0 : index
    %c0_24 = arith.constant 0 : index
    %42 = vector.load %arg8[%c0_23, %c0_24] : memref<1x32xf32, #tpu.memory_space<vmem>>, vector<1x32xf32>
    tpu.vector_store %arg8[%c0_23, %c0_24], %41 {strides = array<i32>} : memref<1x32xf32, #tpu.memory_space<vmem>>, vector<1x32xf32>,
    %c0_25 = arith.constant 0 : index
    %c0_26 = arith.constant 0 : index
    %43 = vector.load %arg3[%c0_25, %c0_26] : memref<128x14xf32, #tpu.memory_space<vmem>>, vector<128x14xf32>
    %c0_27 = arith.constant 0 : index
    %c0_28 = arith.constant 0 : index
    %44 = vector.load %arg6[%c0_27, %c0_28] : memref<14x64xf32, #tpu.memory_space<vmem>>, vector<14x64xf32>
    %cst_29 = arith.constant dense<0.000000e+00> : vector<128x64xf32>
    %45 = tpu.matmul %43, %44, %cst_29 {dimension_numbers = #tpu.dot_dimension_numbers<[1], [0], [0], [1], [0, 0, 1, 1], [], []>} : vector<128x14xf32>, vector<14x64xf32>, vector<128x64xf32> -> vector<128x64xf32>
    %46 = vector.extract_strided_slice %45 {offsets = [0, 0], sizes = [128, 32], strides = [1, 1]} : vector<128x64xf32> to vector<128x32xf32>
    %47 = vector.extract_strided_slice %45 {offsets = [0, 32], sizes = [128, 32], strides = [1, 1]} : vector<128x64xf32> to vector<128x32xf32>
    %c0_30 = arith.constant 0 : index
    %c0_31 = arith.constant 0 : index
    %48 = vector.load %arg9[%c0_30, %c0_31] : memref<128x32xf32, #tpu.memory_space<vmem>>, vector<128x32xf32>
    tpu.vector_store %arg9[%c0_30, %c0_31], %46 {strides = array<i32>} : memref<128x32xf32, #tpu.memory_space<vmem>>, vector<128x32xf32>,
    %c0_32 = arith.constant 0 : index
    %c0_33 = arith.constant 0 : index
    %49 = vector.load %arg10[%c0_32, %c0_33] : memref<128x32xf32, #tpu.memory_space<vmem>>, vector<128x32xf32>
    tpu.vector_store %arg10[%c0_32, %c0_33], %47 {strides = array<i32>} : memref<128x32xf32, #tpu.memory_space<vmem>>, vector<128x32xf32>,
    %cst_34 = arith.constant dense<0.000000e+00> : vector<1x128xf32>
    %50 = tpu.matmul %3, %46, %cst_34 {dimension_numbers = #tpu.dot_dimension_numbers<[1], [1], [0], [0], [0, 0, 1, 0], [], []>} : vector<1x32xf32>, vector<128x32xf32>, vector<1x128xf32> -> vector<1x128xf32>
    %c0_35 = arith.constant 0 : index
    %c0_36 = arith.constant 0 : index
    %51 = vector.load %arg11[%c0_35, %c0_36] : memref<1x128xf32, #tpu.memory_space<vmem>>, vector<1x128xf32>
    tpu.vector_store %arg11[%c0_35, %c0_36], %50 {strides = array<i32>} : memref<1x128xf32, #tpu.memory_space<vmem>>, vector<1x128xf32>,
    return
  }
  func.func @transform_0(%arg0: i32) -> (i32, i32) {
    %c0_i32 = arith.constant 0 : i32
    %c0_i32_0 = arith.constant 0 : i32
    %c0_i32_1 = arith.constant 0 : i32
    return %c0_i32, %c0_i32_0 : i32, i32
  }
  func.func @transform_1(%arg0: i32) -> (i32, i32) {
    %c0_i32 = arith.constant 0 : i32
    %c0_i32_0 = arith.constant 0 : i32
    %c0_i32_1 = arith.constant 0 : i32
    return %c0_i32, %c0_i32_0 : i32, i32
  }
  func.func @transform_2(%arg0: i32) -> (i32, i32) {
    %c0_i32 = arith.constant 0 : i32
    %c0_i32_0 = arith.constant 0 : i32
    %c0_i32_1 = arith.constant 0 : i32
    return %c0_i32, %c0_i32_0 : i32, i32
  }
  func.func @transform_3(%arg0: i32) -> (i32, i32) {
    %c0_i32 = arith.constant 0 : i32
    %c0_i32_0 = arith.constant 0 : i32
    %c0_i32_1 = arith.constant 0 : i32
    return %c0_i32, %c0_i32_0 : i32, i32
  }
  func.func @transform_4(%arg0: i32) -> (i32, i32) {
    %c0_i32 = arith.constant 0 : i32
    %c0_i32_0 = arith.constant 0 : i32
    %c0_i32_1 = arith.constant 0 : i32
    return %c0_i32, %c0_i32_0 : i32, i32
  }
  func.func @transform_5(%arg0: i32) -> (i32, i32) {
    %c0_i32 = arith.constant 0 : i32
    %c0_i32_0 = arith.constant 0 : i32
    %c0_i32_1 = arith.constant 0 : i32
    return %c0_i32, %c0_i32_0 : i32, i32
  }
  func.func @transform_6(%arg0: i32) -> (i32, i32) {
    %c0_i32 = arith.constant 0 : i32
    %c0_i32_0 = arith.constant 0 : i32
    %c0_i32_1 = arith.constant 0 : i32
    return %c0_i32, %c0_i32_0 : i32, i32
  }
  func.func @transform_7(%arg0: i32) -> (i32, i32) {
    %c0_i32 = arith.constant 0 : i32
    %c0_i32_0 = arith.constant 0 : i32
    %c0_i32_1 = arith.constant 0 : i32
    return %c0_i32, %c0_i32_0 : i32, i32
  }
  func.func @transform_8(%arg0: i32) -> (i32, i32) {
    %c0_i32 = arith.constant 0 : i32
    %c0_i32_0 = arith.constant 0 : i32
    %c0_i32_1 = arith.constant 0 : i32
    return %c0_i32, %c0_i32_0 : i32, i32
  }
  func.func @transform_9(%arg0: i32) -> (i32, i32) {
    %c0_i32 = arith.constant 0 : i32
    %c0_i32_0 = arith.constant 0 : i32
    %c0_i32_1 = arith.constant 0 : i32
    return %c0_i32, %c0_i32_0 : i32, i32
  }
  func.func @transform_10(%arg0: i32) -> (i32, i32) {
    %c0_i32 = arith.constant 0 : i32
    %c0_i32_0 = arith.constant 0 : i32
    %c0_i32_1 = arith.constant 0 : i32
    return %c0_i32, %c0_i32_0 : i32, i32
  }
}

module attributes {stable_mosaic.version = 11 : i64} {
  func.func @_main_kernel(%arg0: i32, %arg1: memref<128x128xf32, #tpu.memory_space<vmem>>, %arg2: memref<128x32xf32, #tpu.memory_space<vmem>>, %arg3: memref<128x32xf32, #tpu.memory_space<vmem>>, %arg4: memref<1x128xf32, #tpu.memory_space<vmem>>, %arg5: memref<1x128xf32, #tpu.memory_space<vmem>>, %arg6: memref<7x32xf32, #tpu.memory_space<vmem>>, %arg7: memref<64x32xf32, #tpu.memory_space<vmem>>, %arg8: memref<1x128xf32, #tpu.memory_space<vmem>>) attributes {dimension_semantics = [#tpu.dimension_semantics<parallel>], iteration_bounds = array<i64: 1>, scalar_prefetch = 0 : i64, scratch_operands = 0 : i64, tpu.core_type = #tpu.core_type<tc>, window_params = [{transform_indices = @transform_0, window_bounds = array<i64: 128, 128>}, {pipeline_mode = #tpu.pipeline_mode<synchronous>, transform_indices = @transform_1, window_bounds = array<i64: 128, 32>}, {pipeline_mode = #tpu.pipeline_mode<synchronous>, transform_indices = @transform_2, window_bounds = array<i64: 128, 32>}, {pipeline_mode = #tpu.pipeline_mode<synchronous>, transform_indices = @transform_3, window_bounds = array<i64: 1, 128>}, {pipeline_mode = #tpu.pipeline_mode<synchronous>, transform_indices = @transform_4, window_bounds = array<i64: 1, 128>}, {pipeline_mode = #tpu.pipeline_mode<synchronous>, transform_indices = @transform_5, window_bounds = array<i64: 7, 32>}, {pipeline_mode = #tpu.pipeline_mode<synchronous>, transform_indices = @transform_6, window_bounds = array<i64: 64, 32>}, {transform_indices = @transform_7, window_bounds = array<i64: 1, 128>}]} {
    %c128_i32 = arith.constant 128 : i32
    %0 = arith.muli %arg0, %c128_i32 : i32
    %1 = tpu.assume_multiple %0, 128 : i32
    %c1 = arith.constant 1 : index
    %c0 = arith.constant 0 : index
    %2 = vector.load %arg6[%c1, %c0] : memref<7x32xf32, #tpu.memory_space<vmem>>, vector<1x32xf32>
    %c2 = arith.constant 2 : index
    %c0_0 = arith.constant 0 : index
    %3 = vector.load %arg6[%c2, %c0_0] : memref<7x32xf32, #tpu.memory_space<vmem>>, vector<1x32xf32>
    %c3 = arith.constant 3 : index
    %c0_1 = arith.constant 0 : index
    %4 = vector.load %arg6[%c3, %c0_1] : memref<7x32xf32, #tpu.memory_space<vmem>>, vector<1x32xf32>
    %c4 = arith.constant 4 : index
    %c0_2 = arith.constant 0 : index
    %5 = vector.load %arg6[%c4, %c0_2] : memref<7x32xf32, #tpu.memory_space<vmem>>, vector<1x32xf32>
    %c5 = arith.constant 5 : index
    %c0_3 = arith.constant 0 : index
    %6 = vector.load %arg6[%c5, %c0_3] : memref<7x32xf32, #tpu.memory_space<vmem>>, vector<1x32xf32>
    %c6 = arith.constant 6 : index
    %c0_4 = arith.constant 0 : index
    %7 = vector.load %arg6[%c6, %c0_4] : memref<7x32xf32, #tpu.memory_space<vmem>>, vector<1x1xf32>
    %c0_5 = arith.constant 0 : index
    %c0_6 = arith.constant 0 : index
    %8 = vector.load %arg1[%c0_5, %c0_6] : memref<128x128xf32, #tpu.memory_space<vmem>>, vector<128x128xf32>
    %cst = arith.constant 0.000000e+00 : f32
    %9 = vector.broadcast %cst : f32 to vector<128x128xf32>
    %10 = arith.cmpf ogt, %8, %9 : vector<128x128xf32>
    %cst_7 = arith.constant dense<0.000000e+00> : vector<128xf32>
    %11 = vector.multi_reduction <add>, %8, %cst_7 [1] : vector<128x128xf32> to vector<128xf32>
    %12 = vector.shape_cast %11 : vector<128xf32> to vector<128x1xf32>
    %13 = math.rsqrt %12 : vector<128x1xf32>
    %14 = vector.broadcast %13 : vector<128x1xf32> to vector<128x128xf32>
    %15 = arith.mulf %14, %8 : vector<128x128xf32>
    %c0_8 = arith.constant 0 : index
    %c0_9 = arith.constant 0 : index
    %16 = vector.load %arg5[%c0_8, %c0_9] : memref<1x128xf32, #tpu.memory_space<vmem>>, vector<1x128xf32>
    %17 = math.rsqrt %16 : vector<1x128xf32>
    %18 = vector.broadcast %17 : vector<1x128xf32> to vector<128x128xf32>
    %19 = arith.mulf %15, %18 : vector<128x128xf32>
    %20 = arith.truncf %19 : vector<128x128xf32> to vector<128x128xbf16>
    %c0_10 = arith.constant 0 : index
    %c0_11 = arith.constant 0 : index
    %21 = vector.load %arg3[%c0_10, %c0_11] : memref<128x32xf32, #tpu.memory_space<vmem>>, vector<128x32xf32>
    %22 = arith.truncf %21 : vector<128x32xf32> to vector<128x32xbf16>
    %cst_12 = arith.constant dense<0.000000e+00> : vector<128x32xf32>
    %23 = tpu.matmul %20, %22, %cst_12 {dimension_numbers = #tpu.dot_dimension_numbers<[1], [0], [0], [1], [0, 0, 1, 1], [], []>} : vector<128x128xbf16>, vector<128x32xbf16>, vector<128x32xf32> -> vector<128x32xf32>
    %24 = vector.broadcast %4 : vector<1x32xf32> to vector<128x32xf32>
    %25 = arith.addf %23, %24 : vector<128x32xf32>
    %cst_13 = arith.constant 0.000000e+00 : f32
    %26 = vector.broadcast %cst_13 : f32 to vector<128x32xf32>
    %27 = arith.maximumf %25, %26 : vector<128x32xf32>
    %28 = arith.index_cast %1 : i32 to index
    %c0_14 = arith.constant 0 : index
    %29 = vector.load %arg2[%28, %c0_14] : memref<128x32xf32, #tpu.memory_space<vmem>>, vector<128x32xf32>
    %30 = vector.broadcast %2 : vector<1x32xf32> to vector<128x32xf32>
    %31 = arith.mulf %29, %30 : vector<128x32xf32>
    %cst_15 = arith.constant dense<0.000000e+00> : vector<128xf32>
    %32 = vector.multi_reduction <add>, %31, %cst_15 [1] : vector<128x32xf32> to vector<128xf32>
    %33 = vector.shape_cast %32 : vector<128xf32> to vector<128x1xf32>
    %c0_16 = arith.constant 0 : index
    %c0_17 = arith.constant 0 : index
    %34 = vector.load %arg4[%c0_16, %c0_17] : memref<1x128xf32, #tpu.memory_space<vmem>>, vector<1x128xf32>
    %35 = vector.broadcast %33 : vector<128x1xf32> to vector<128x128xf32>
    %36 = vector.broadcast %34 : vector<1x128xf32> to vector<128x128xf32>
    %37 = arith.addf %35, %36 : vector<128x128xf32>
    %cst_18 = arith.constant 0.000000e+00 : f32
    %38 = vector.broadcast %cst_18 : f32 to vector<128x128xf32>
    %39 = arith.cmpf ogt, %37, %38 : vector<128x128xf32>
    %cst_19 = arith.constant 2.000000e-01 : f32
    %40 = vector.broadcast %cst_19 : f32 to vector<128x128xf32>
    %41 = arith.mulf %40, %37 : vector<128x128xf32>
    %42 = arith.select %39, %37, %41 : vector<128x128xi1>, vector<128x128xf32>
    %cst_20 = arith.constant -1.000000e+30 : f32
    %43 = vector.broadcast %cst_20 : f32 to vector<128x128xf32>
    %44 = arith.select %10, %42, %43 : vector<128x128xi1>, vector<128x128xf32>
    %cst_21 = arith.constant dense<0xFF800000> : vector<128xf32>
    %45 = vector.multi_reduction <maximumf>, %44, %cst_21 [1] : vector<128x128xf32> to vector<128xf32>
    %46 = vector.shape_cast %45 : vector<128xf32> to vector<128x1xf32>
    %47 = vector.broadcast %46 : vector<128x1xf32> to vector<128x128xf32>
    %48 = arith.subf %44, %47 : vector<128x128xf32>
    %49 = math.exp %48 : vector<128x128xf32>
    %cst_22 = arith.constant 0.000000e+00 : f32
    %50 = vector.broadcast %cst_22 : f32 to vector<128x128xf32>
    %51 = arith.select %10, %49, %50 : vector<128x128xi1>, vector<128x128xf32>
    %cst_23 = arith.constant dense<0.000000e+00> : vector<128xf32>
    %52 = vector.multi_reduction <add>, %51, %cst_23 [1] : vector<128x128xf32> to vector<128xf32>
    %53 = vector.shape_cast %52 : vector<128xf32> to vector<128x1xf32>
    %54 = tpu.reciprocal %53 {approx = true} : vector<128x1xf32> -> vector<128x1xf32>
    %55 = vector.broadcast %54 : vector<128x1xf32> to vector<128x128xf32>
    %56 = arith.mulf %51, %55 : vector<128x128xf32>
    %57 = arith.truncf %56 : vector<128x128xf32> to vector<128x128xbf16>
    %c0_24 = arith.constant 0 : index
    %c0_25 = arith.constant 0 : index
    %58 = vector.load %arg2[%c0_24, %c0_25] : memref<128x32xf32, #tpu.memory_space<vmem>>, vector<128x32xf32>
    %59 = arith.truncf %58 : vector<128x32xf32> to vector<128x32xbf16>
    %cst_26 = arith.constant dense<0.000000e+00> : vector<128x32xf32>
    %60 = tpu.matmul %57, %59, %cst_26 {dimension_numbers = #tpu.dot_dimension_numbers<[1], [0], [0], [1], [0, 0, 1, 1], [], []>} : vector<128x128xbf16>, vector<128x32xbf16>, vector<128x32xf32> -> vector<128x32xf32>
    %61 = vector.broadcast %3 : vector<1x32xf32> to vector<128x32xf32>
    %62 = arith.addf %60, %61 : vector<128x32xf32>
    %cst_27 = arith.constant 0.000000e+00 : f32
    %63 = vector.broadcast %cst_27 : f32 to vector<128x32xf32>
    %64 = arith.cmpf ogt, %62, %63 : vector<128x32xf32>
    %cst_28 = arith.constant 0.000000e+00 : f32
    %65 = vector.broadcast %cst_28 : f32 to vector<128x32xf32>
    %66 = arith.minimumf %62, %65 : vector<128x32xf32>
    %67 = math.exp %66 : vector<128x32xf32>
    %cst_29 = arith.constant 1.000000e+00 : f32
    %68 = vector.broadcast %cst_29 : f32 to vector<128x32xf32>
    %69 = arith.subf %67, %68 : vector<128x32xf32>
    %70 = arith.select %64, %62, %69 : vector<128x32xi1>, vector<128x32xf32>
    %71 = tpu.concatenate %70, %27 in 1 : vector<128x32xf32>, vector<128x32xf32> -> vector<128x64xf32>
    %c0_30 = arith.constant 0 : index
    %c0_31 = arith.constant 0 : index
    %72 = vector.load %arg7[%c0_30, %c0_31] : memref<64x32xf32, #tpu.memory_space<vmem>>, vector<64x32xf32>
    %cst_32 = arith.constant dense<0.000000e+00> : vector<128x32xf32>
    %73 = tpu.matmul %71, %72, %cst_32 {dimension_numbers = #tpu.dot_dimension_numbers<[1], [0], [0], [1], [0, 0, 1, 1], [], []>} : vector<128x64xf32>, vector<64x32xf32>, vector<128x32xf32> -> vector<128x32xf32>
    %74 = vector.broadcast %5 : vector<1x32xf32> to vector<128x32xf32>
    %75 = arith.addf %73, %74 : vector<128x32xf32>
    %cst_33 = arith.constant 0.000000e+00 : f32
    %76 = vector.broadcast %cst_33 : f32 to vector<128x32xf32>
    %77 = arith.maximumf %75, %76 : vector<128x32xf32>
    %cst_34 = arith.constant dense<0.000000e+00> : vector<1x128xf32>
    %78 = tpu.matmul %6, %77, %cst_34 {dimension_numbers = #tpu.dot_dimension_numbers<[1], [1], [0], [0], [0, 0, 1, 0], [], []>} : vector<1x32xf32>, vector<128x32xf32>, vector<1x128xf32> -> vector<1x128xf32>
    %79 = vector.broadcast %7 : vector<1x1xf32> to vector<1x128xf32>
    %80 = arith.addf %78, %79 : vector<1x128xf32>
    %c0_35 = arith.constant 0 : index
    %c0_36 = arith.constant 0 : index
    %81 = vector.load %arg8[%c0_35, %c0_36] : memref<1x128xf32, #tpu.memory_space<vmem>>, vector<1x128xf32>
    tpu.vector_store %arg8[%c0_35, %c0_36], %80 {strides = array<i32>} : memref<1x128xf32, #tpu.memory_space<vmem>>, vector<1x128xf32>,
    return
  }
  func.func @transform_0(%arg0: i32) -> (i32, i32) {
    %c0_i32 = arith.constant 0 : i32
    %c0_i32_0 = arith.constant 0 : i32
    return %arg0, %c0_i32 : i32, i32
  }
  func.func @transform_1(%arg0: i32) -> (i32, i32) {
    %c0_i32 = arith.constant 0 : i32
    %c0_i32_0 = arith.constant 0 : i32
    %c0_i32_1 = arith.constant 0 : i32
    return %c0_i32, %c0_i32_0 : i32, i32
  }
  func.func @transform_2(%arg0: i32) -> (i32, i32) {
    %c0_i32 = arith.constant 0 : i32
    %c0_i32_0 = arith.constant 0 : i32
    %c0_i32_1 = arith.constant 0 : i32
    return %c0_i32, %c0_i32_0 : i32, i32
  }
  func.func @transform_3(%arg0: i32) -> (i32, i32) {
    %c0_i32 = arith.constant 0 : i32
    %c0_i32_0 = arith.constant 0 : i32
    %c0_i32_1 = arith.constant 0 : i32
    return %c0_i32, %c0_i32_0 : i32, i32
  }
  func.func @transform_4(%arg0: i32) -> (i32, i32) {
    %c0_i32 = arith.constant 0 : i32
    %c0_i32_0 = arith.constant 0 : i32
    %c0_i32_1 = arith.constant 0 : i32
    return %c0_i32, %c0_i32_0 : i32, i32
  }
  func.func @transform_5(%arg0: i32) -> (i32, i32) {
    %c0_i32 = arith.constant 0 : i32
    %c0_i32_0 = arith.constant 0 : i32
    %c0_i32_1 = arith.constant 0 : i32
    return %c0_i32, %c0_i32_0 : i32, i32
  }
  func.func @transform_6(%arg0: i32) -> (i32, i32) {
    %c0_i32 = arith.constant 0 : i32
    %c0_i32_0 = arith.constant 0 : i32
    %c0_i32_1 = arith.constant 0 : i32
    return %c0_i32, %c0_i32_0 : i32, i32
  }
  func.func @transform_7(%arg0: i32) -> (i32, i32) {
    %c0_i32 = arith.constant 0 : i32
    %c0_i32_0 = arith.constant 0 : i32
    return %c0_i32, %arg0 : i32, i32
  }
}

</mosaic_0001>

<llo_original>
// kernel: dual_branch_gnn_forward.2
$region0: #{dual_branch_gnn_forward.2}
  #allocation0 [shape = 'u32[]', space=smem, size = 0x4, offset = 0x4, fixed_abs, tag = 'smem constant byte address 0x4 - core index']
  #allocation1 [shape = 'u32[144,128]{1,0:T(1,128)}', space=vmem, size = 0x12000, scoped, tag = 'internal scratch']
  %s0 = inlined_call_operand.vmem [shape: f32[32,10], index: 0, kind: input, shape index: {}]
  %s1 = inlined_call_operand.vmem [shape: f32[1,32], index: 1, kind: input, shape index: {}]
  %s2 = inlined_call_operand.vmem [shape: f32[128,14], index: 2, kind: input, shape index: {}]
  %s3 = inlined_call_operand.vmem [shape: f32[10,10], index: 3, kind: input, shape index: {}]
  %s4 = inlined_call_operand.vmem [shape: f32[3,10], index: 4, kind: input, shape index: {}]
  %s5 = inlined_call_operand.vmem [shape: f32[14,64], index: 5, kind: input, shape index: {}]
  %s6 = inlined_call_operand.vmem [shape: f32[7,32], index: 6, kind: input, shape index: {}]
  %s7 = inlined_call_operand.vmem [shape: f32[1,32], index: 7, kind: output, shape index: {0}]
  %s8 = inlined_call_operand.vmem [shape: f32[128,32], index: 8, kind: output, shape index: {1}]
  %s9 = inlined_call_operand.vmem [shape: f32[128,32], index: 9, kind: output, shape index: {2}]
  %s10 = inlined_call_operand.vmem [shape: f32[1,128], index: 10, kind: output, shape index: {3}]
  %11 = xla_tuple %s7, %s8, %s9, %s10
  %s12 = sld [smem:[#allocation0]]
  $region62: #{dual_branch_gnn_forward.2} parent=0
    _
  %s14 = ssub.s32 1, %s12
  %s15 = scalar_select 0, %s14, %s12
  // Predicated region
  $region2: #{dual_branch_gnn_forward.2} parent=0 // pred_check
    _
  $region3: #{dual_branch_gnn_forward.2} parent=0 // pred_check_branch
    %17 = sbr.rel (0) target = $region5
  $region4: #{dual_branch_gnn_forward.2} parent=0 // pred_region
    _
  $region5: #{dual_branch_gnn_forward.2} parent=0 // pred_fallthru
    _
  // Predicated region
  $region6: #{dual_branch_gnn_forward.2} parent=0 // pred_check
    _
  $region7: #{dual_branch_gnn_forward.2} parent=0 // pred_check_branch
    %19 = sbr.rel (0) target = $region9
  $region8: #{dual_branch_gnn_forward.2} parent=0 // pred_region
    _
  $region9: #{dual_branch_gnn_forward.2} parent=0 // pred_fallthru
    _
  // Predicated region
  $region10: #{dual_branch_gnn_forward.2} parent=0 // pred_check
    _
  $region11: #{dual_branch_gnn_forward.2} parent=0 // pred_check_branch
    %21 = sbr.rel (0) target = $region13
  $region12: #{dual_branch_gnn_forward.2} parent=0 // pred_region
    _
  $region13: #{dual_branch_gnn_forward.2} parent=0 // pred_fallthru
    _
  // Predicated region
  $region14: #{dual_branch_gnn_forward.2} parent=0 // pred_check
    _
  $region15: #{dual_branch_gnn_forward.2} parent=0 // pred_check_branch
    %23 = sbr.rel (0) target = $region17
  $region16: #{dual_branch_gnn_forward.2} parent=0 // pred_region
    _
  $region17: #{dual_branch_gnn_forward.2} parent=0 // pred_fallthru
    _
  // Predicated region
  $region18: #{dual_branch_gnn_forward.2} parent=0 // pred_check
    _
  $region19: #{dual_branch_gnn_forward.2} parent=0 // pred_check_branch
    %25 = sbr.rel (0) target = $region21
  $region20: #{dual_branch_gnn_forward.2} parent=0 // pred_region
    _
  $region21: #{dual_branch_gnn_forward.2} parent=0 // pred_fallthru
    _
  // Predicated region
  $region22: #{dual_branch_gnn_forward.2} parent=0 // pred_check
    _
  $region23: #{dual_branch_gnn_forward.2} parent=0 // pred_check_branch
    %27 = sbr.rel (0) target = $region25
  $region24: #{dual_branch_gnn_forward.2} parent=0 // pred_region
    _
  $region25: #{dual_branch_gnn_forward.2} parent=0 // pred_fallthru
    _
  // Predicated region
  $region26: #{dual_branch_gnn_forward.2} parent=0 // pred_check
    _
  $region27: #{dual_branch_gnn_forward.2} parent=0 // pred_check_branch
    %29 = sbr.rel (0) target = $region29
  $region28: #{dual_branch_gnn_forward.2} parent=0 // pred_region
    _
  $region29: #{dual_branch_gnn_forward.2} parent=0 // pred_fallthru
    _
  %v30 = vld [vmem:[%s4] sm:$0x1]
  %v31 = vld [vmem:[%s4 + $0x1] sm:$0x1]
  %v32 = vld [vmem:[%s4 + $0x2] sm:$0x1]
  %v33 = vld [vmem:[%s6] sm:$0x1]
  %v34 = vld [vmem:[%s0] sm:$0xff]
  %v35 = vld [vmem:[%s0 + $0x8] sm:$0xff]
  %v36 = vld [vmem:[%s0 + $0x10] sm:$0xff]
  %v37 = vld [vmem:[%s0 + $0x18] sm:$0xff]
  %v38 = vld [vmem:[%s3] sm:$0xff]
  %v39 = vld [vmem:[%s3 + $0x8] sm:$0x3]
  %v40 = vlaneseq
  %v41 = vshrl.u32 %v40, 7
  %v42 = vsub.s32 0, %v41
  %v43 = vrot.slane %v30, %v42
  %vm44 = vcmask 80896
  %v46 = vsel %vm44, %v34, 0
  %v49 = vsel %vm44, %v35, 0
  %v52 = vsel %vm44, %v36, 0
  %v55 = vsel %vm44, %v37, 0
  %vm57 = vcmask 1041408
  %v59 = vsel %vm57, %v39, 0
  %61 = vmatprep.subr.mxu0 0.0
  %62 = vmatpush1.msra.mxu0 %v38
  %63 = vmatprep.subr.mxu0 0.0
  %64 = vmatpush1.msra.mxu0 %v59
  %65 = vmatprep.subr.mxu0 0.0
  %66 = vmatpush1.msra.mxu0 0.0
  %67 = vmatprep.subr.mxu0 0.0
  %68 = vmatpush1.msra.mxu0 0.0
  %69 = vmatprep.subr.mxu0 0.0
  %70 = vmatpush1.msra.mxu0 0.0
  %71 = vmatprep.subr.mxu0 0.0
  %72 = vmatpush1.msra.mxu0 0.0
  %73 = vmatprep.subr.mxu0 0.0
  %74 = vmatpush1.msra.mxu0 0.0
  %75 = vmatprep.subr.mxu0 0.0
  %76 = vmatpush1.msra.mxu0 0.0
  %77 = vmatprep.subr.mxu0 0.0
  %78 = vmatpush1.msra.mxu0 0.0
  %79 = vmatprep.subr.mxu0 0.0
  %80 = vmatpush1.msra.mxu0 0.0
  %81 = vmatprep.subr.mxu0 0.0
  %82 = vmatpush1.msra.mxu0 0.0
  %83 = vmatprep.subr.mxu0 0.0
  %84 = vmatpush1.msra.mxu0 0.0
  %85 = vmatprep.subr.mxu0 0.0
  %86 = vmatpush1.msra.mxu0 0.0
  %87 = vmatprep.subr.mxu0 0.0
  %88 = vmatpush1.msra.mxu0 0.0
  %89 = vmatprep.subr.mxu0 0.0
  %90 = vmatpush1.msra.mxu0 0.0
  %91 = vmatprep.subr.mxu0 0.0
  %92 = vmatpush1.msra.mxu0 0.0
  %93 = vmatprep.subr.mxu0 0.0
  %94 = vmatpush1.msra.mxu0 0.0
  %95 = vmatprep.subr.mxu0 0.0
  %96 = vmatpush1.msra.mxu0 0.0
  %97 = vmatprep.subr.mxu0 0.0
  %98 = vmatpush1.msra.mxu0 0.0
  %99 = vmatprep.subr.mxu0 0.0
  %100 = vmatpush1.msra.mxu0 0.0
  %101 = vmatprep.subr.mxu0 0.0
  %102 = vmatpush1.msra.mxu0 0.0
  %103 = vmatprep.subr.mxu0 0.0
  %104 = vmatpush1.msra.mxu0 0.0
  %105 = vmatprep.subr.mxu0 0.0
  %106 = vmatpush1.msra.mxu0 0.0
  %107 = vmatprep.subr.mxu0 0.0
  %108 = vmatpush1.msra.mxu0 0.0
  %109 = vmatprep.subr.mxu0 0.0
  %110 = vmatpush1.msra.mxu0 0.0
  %111 = vmatprep.subr.mxu0 0.0
  %112 = vmatpush1.msra.mxu0 0.0
  %113 = vmatprep.subr.mxu0 0.0
  %114 = vmatpush1.msra.mxu0 0.0
  %115 = vmatprep.subr.mxu0 0.0
  %116 = vmatpush1.msra.mxu0 0.0
  %117 = vmatprep.subr.mxu0 0.0
  %118 = vmatpush1.msra.mxu0 0.0
  %119 = vmatprep.subr.mxu0 0.0
  %120 = vmatpush1.msra.mxu0 0.0
  %121 = vmatprep.subr.mxu0 0.0
  %122 = vmatpush1.msra.mxu0 0.0
  %123 = vmatprep.subr.mxu0 0.0
  %124 = vmatpush1.msra.mxu0 0.0
  %125 = vmatprep.mubr.f32.mxu0 0.0
  %126 = vmatmul.mubr.f32.gmra.mrb[0].mxu0 %v46
  %v127 = vpop.f32.mrb[0].mxu0
  %v128 = vadd.f32 %v43, %v127
  %v129 = vpop.f32.mrb[0].mxu0
  %130 = vmatprep.mubr.f32.mxu0 0.0
  %131 = vmatmul.mubr.f32.gmra.mrb[0].mxu0 %v49
  %v132 = vpop.f32.mrb[0].mxu0
  %v133 = vadd.f32 %v43, %v132
  %v134 = vpop.f32.mrb[0].mxu0
  %135 = vmatprep.mubr.f32.mxu0 0.0
  %136 = vmatmul.mubr.f32.gmra.mrb[0].mxu0 %v52
  %v137 = vpop.f32.mrb[0].mxu0
  %v138 = vadd.f32 %v43, %v137
  %v139 = vpop.f32.mrb[0].mxu0
  %140 = vmatprep.mubr.f32.mxu0 0.0
  %141 = vmatmul.mubr.f32.gmra.mrb[0].mxu0 %v55
  %v142 = vpop.f32.mrb[0].mxu0
  %v143 = vadd.f32 %v43, %v142
  %v144 = vpop.f32.mrb[0].mxu0
  %145 = vdwg.mxu0
  %vm146 = vcmp.gt.f32.partialorder %v128, 0.0
  %vm147 = vcmp.gt.f32.partialorder %v133, 0.0
  %vm148 = vcmp.gt.f32.partialorder %v138, 0.0
  %vm149 = vcmp.gt.f32.partialorder %v143, 0.0
  %v150 = vmin.f32 %v128, 0.0
  %v151 = vmin.f32 %v133, 0.0
  %v152 = vmin.f32 %v138, 0.0
  %v153 = vmin.f32 %v143, 0.0
  %v154 = vmul.f32 %v150, 1.442695
  %v155 = vpow.pop %v154
  %v156 = vmul.f32 %v151, 1.442695
  %v157 = vpow.pop %v156
  %v158 = vmul.f32 %v152, 1.442695
  %v159 = vpow.pop %v158
  %v160 = vmul.f32 %v153, 1.442695
  %v161 = vpow.pop %v160
  %v162 = vsub.f32 %v155, 1.0
  %v163 = vsub.f32 %v157, 1.0
  %v164 = vsub.f32 %v159, 1.0
  %v165 = vsub.f32 %v161, 1.0
  %v166 = vsel %vm146, %v128, %v162
  %v167 = vsel %vm147, %v133, %v163
  %v168 = vsel %vm148, %v138, %v164
  %v169 = vsel %vm149, %v143, %v165
  %171 = vset.pattern.permute.xlu0 0
  %172 = vperm.xlu0 %171, %v32
  %v173 = vpop.permute.xlu0 %172
  %v176 = vsel %vm44, %v31, 0
  %v179 = vsel %vm44, %v166, 0
  %v182 = vsel %vm44, %v167, 0
  %v185 = vsel %vm44, %v168, 0
  %v188 = vsel %vm44, %v169, 0
  %190 = vmatprep.subr.mxu0 0.0
  %191 = vmatpush1.xpose.msra.mxu0 %v179
  %192 = vmatprep.subr.mxu0 0.0
  %193 = vmatpush1.xpose.msra.mxu0 %v182
  %194 = vmatprep.subr.mxu0 0.0
  %195 = vmatpush1.xpose.msra.mxu0 %v185
  %196 = vmatprep.subr.mxu0 0.0
  %197 = vmatpush1.xpose.msra.mxu0 %v188
  %198 = vmatprep.subr.mxu0 0.0
  %199 = vmatpush1.xpose.msra.mxu0 0.0
  %200 = vmatprep.subr.mxu0 0.0
  %201 = vmatpush1.xpose.msra.mxu0 0.0
  %202 = vmatprep.subr.mxu0 0.0
  %203 = vmatpush1.xpose.msra.mxu0 0.0
  %204 = vmatprep.subr.mxu0 0.0
  %205 = vmatpush1.xpose.msra.mxu0 0.0
  %206 = vmatprep.subr.mxu0 0.0
  %207 = vmatpush1.xpose.msra.mxu0 0.0
  %208 = vmatprep.subr.mxu0 0.0
  %209 = vmatpush1.xpose.msra.mxu0 0.0
  %210 = vmatprep.subr.mxu0 0.0
  %211 = vmatpush1.xpose.msra.mxu0 0.0
  %212 = vmatprep.subr.mxu0 0.0
  %213 = vmatpush1.xpose.msra.mxu0 0.0
  %214 = vmatprep.subr.mxu0 0.0
  %215 = vmatpush1.xpose.msra.mxu0 0.0
  %216 = vmatprep.subr.mxu0 0.0
  %217 = vmatpush1.xpose.msra.mxu0 0.0
  %218 = vmatprep.subr.mxu0 0.0
  %219 = vmatpush1.xpose.msra.mxu0 0.0
  %220 = vmatprep.subr.mxu0 0.0
  %221 = vmatpush1.xpose.msra.mxu0 0.0
  %222 = vmatprep.subr.mxu0 0.0
  %223 = vmatpush1.xpose.msra.mxu0 0.0
  %224 = vmatprep.subr.mxu0 0.0
  %225 = vmatpush1.xpose.msra.mxu0 0.0
  %226 = vmatprep.subr.mxu0 0.0
  %227 = vmatpush1.xpose.msra.mxu0 0.0
  %228 = vmatprep.subr.mxu0 0.0
  %229 = vmatpush1.xpose.msra.mxu0 0.0
  %230 = vmatprep.subr.mxu0 0.0
  %231 = vmatpush1.xpose.msra.mxu0 0.0
  %232 = vmatprep.subr.mxu0 0.0
  %233 = vmatpush1.xpose.msra.mxu0 0.0
  %234 = vmatprep.subr.mxu0 0.0
  %235 = vmatpush1.xpose.msra.mxu0 0.0
  %236 = vmatprep.subr.mxu0 0.0
  %237 = vmatpush1.xpose.msra.mxu0 0.0
  %238 = vmatprep.subr.mxu0 0.0
  %239 = vmatpush1.xpose.msra.mxu0 0.0
  %240 = vmatprep.subr.mxu0 0.0
  %241 = vmatpush1.xpose.msra.mxu0 0.0
  %242 = vmatprep.subr.mxu0 0.0
  %243 = vmatpush1.xpose.msra.mxu0 0.0
  %244 = vmatprep.subr.mxu0 0.0
  %245 = vmatpush1.xpose.msra.mxu0 0.0
  %246 = vmatprep.subr.mxu0 0.0
  %247 = vmatpush1.xpose.msra.mxu0 0.0
  %248 = vmatprep.subr.mxu0 0.0
  %249 = vmatpush1.xpose.msra.mxu0 0.0
  %250 = vmatprep.subr.mxu0 0.0
  %251 = vmatpush1.xpose.msra.mxu0 0.0
  %252 = vmatprep.subr.mxu0 0.0
  %253 = vmatpush1.xpose.msra.mxu0 0.0
  %254 = vmatprep.mubr.f32.mxu0 0.0
  %255 = vmatmul.mubr.f32.gmra.mrb[0].mxu0 %v176
  %v256 = vpop.f32.mrb[0].mxu0
  %v257 = vadd.f32 %v173, %v256
  %v258 = vpop.f32.mrb[0].mxu0
  %259 = vdwg.mxu0
  %v260 = vld [vmem:[%s1] sm:$0x1]
  %v261 = vmul.f32 %v260, -0.00055555557
  %v262 = vmul.f32 %v261, 1.442695
  %v263 = vpow.pop %v262
  %v264 = vadd.f32 %v257, 1.0
  %v265 = vmul.f32 %v263, %v264
  %v266 = vsub.f32 %v265, 1.0
  %v267 = vxor.u32 %v266, 2147483648
  %v268 = vmul.f32 %v267, 1.442695
  %v269 = vpow.pop %v268
  %v270 = vadd.f32 %v269, 1.0
  %v271 = vrcp.pop %v270
  %v272 = vmul.f32 1.0, %v271
  %v273 = vmul.f32 %v272, 1.9
  %v274 = vadd.f32 %v273, 0.1
  %vm275 = vcmp.ge.f32.partialorder %v274, 0.2
  %v276 = vsel %vm275, %v274, 0.0
  %vm277 = vcmask 253952
  %278 = vst.msk [vmem:[%s7] sm:$0x1] %vm277, %v276
  %v279 = vld [vmem:[%s2] sm:$0xff]
  %v280 = vld [vmem:[%s2 + $0x8] sm:$0xff]
  %v281 = vld [vmem:[%s2 + $0x10] sm:$0xff]
  %v282 = vld [vmem:[%s2 + $0x18] sm:$0xff]
  %v283 = vld [vmem:[%s2 + $0x20] sm:$0xff]
  %v284 = vld [vmem:[%s2 + $0x28] sm:$0xff]
  %v285 = vld [vmem:[%s2 + $0x30] sm:$0xff]
  %v286 = vld [vmem:[%s2 + $0x38] sm:$0xff]
  %v287 = vld [vmem:[%s2 + $0x40] sm:$0xff]
  %v288 = vld [vmem:[%s2 + $0x48] sm:$0xff]
  %v289 = vld [vmem:[%s2 + $0x50] sm:$0xff]
  %v290 = vld [vmem:[%s2 + $0x58] sm:$0xff]
  %v291 = vld [vmem:[%s2 + $0x60] sm:$0xff]
  %v292 = vld [vmem:[%s2 + $0x68] sm:$0xff]
  %v293 = vld [vmem:[%s2 + $0x70] sm:$0xff]
  %v294 = vld [vmem:[%s2 + $0x78] sm:$0xff]
  %v295 = vld [vmem:[%s5] sm:$0xff]
  %v296 = vld [vmem:[%s5 + $0x8] sm:$0x3f]
  %vm297 = vcmask 113664
  %v299 = vsel %vm297, %v279, 0
  %v302 = vsel %vm297, %v280, 0
  %v305 = vsel %vm297, %v281, 0
  %v308 = vsel %vm297, %v282, 0
  %v311 = vsel %vm297, %v283, 0
  %v314 = vsel %vm297, %v284, 0
  %v317 = vsel %vm297, %v285, 0
  %v320 = vsel %vm297, %v286, 0
  %v323 = vsel %vm297, %v287, 0
  %v326 = vsel %vm297, %v288, 0
  %v329 = vsel %vm297, %v289, 0
  %v332 = vsel %vm297, %v290, 0
  %v335 = vsel %vm297, %v291, 0
  %v338 = vsel %vm297, %v292, 0
  %v341 = vsel %vm297, %v293, 0
  %v344 = vsel %vm297, %v294, 0
  %vm346 = vcmask 1045504
  %v348 = vsel %vm346, %v296, 0
  %350 = vmatprep.subr.mxu0 0.0
  %351 = vmatpush1.msra.mxu0 %v295
  %352 = vmatprep.subr.mxu0 0.0
  %353 = vmatpush1.msra.mxu0 %v348
  %354 = vmatprep.subr.mxu0 0.0
  %355 = vmatpush1.msra.mxu0 0.0
  %356 = vmatprep.subr.mxu0 0.0
  %357 = vmatpush1.msra.mxu0 0.0
  %358 = vmatprep.subr.mxu0 0.0
  %359 = vmatpush1.msra.mxu0 0.0
  %360 = vmatprep.subr.mxu0 0.0
  %361 = vmatpush1.msra.mxu0 0.0
  %362 = vmatprep.subr.mxu0 0.0
  %363 = vmatpush1.msra.mxu0 0.0
  %364 = vmatprep.subr.mxu0 0.0
  %365 = vmatpush1.msra.mxu0 0.0
  %366 = vmatprep.subr.mxu0 0.0
  %367 = vmatpush1.msra.mxu0 0.0
  %368 = vmatprep.subr.mxu0 0.0
  %369 = vmatpush1.msra.mxu0 0.0
  %370 = vmatprep.subr.mxu0 0.0
  %371 = vmatpush1.msra.mxu0 0.0
  %372 = vmatprep.subr.mxu0 0.0
  %373 = vmatpush1.msra.mxu0 0.0
  %374 = vmatprep.subr.mxu0 0.0
  %375 = vmatpush1.msra.mxu0 0.0
  %376 = vmatprep.subr.mxu0 0.0
  %377 = vmatpush1.msra.mxu0 0.0
  %378 = vmatprep.subr.mxu0 0.0
  %379 = vmatpush1.msra.mxu0 0.0
  %380 = vmatprep.subr.mxu0 0.0
  %381 = vmatpush1.msra.mxu0 0.0
  %382 = vmatprep.subr.mxu0 0.0
  %383 = vmatpush1.msra.mxu0 0.0
  %384 = vmatprep.subr.mxu0 0.0
  %385 = vmatpush1.msra.mxu0 0.0
  %386 = vmatprep.subr.mxu0 0.0
  %387 = vmatpush1.msra.mxu0 0.0
  %388 = vmatprep.subr.mxu0 0.0
  %389 = vmatpush1.msra.mxu0 0.0
  %390 = vmatprep.subr.mxu0 0.0
  %391 = vmatpush1.msra.mxu0 0.0
  %392 = vmatprep.subr.mxu0 0.0
  %393 = vmatpush1.msra.mxu0 0.0
  %394 = vmatprep.subr.mxu0 0.0
  %395 = vmatpush1.msra.mxu0 0.0
  %396 = vmatprep.subr.mxu0 0.0
  %397 = vmatpush1.msra.mxu0 0.0
  %398 = vmatprep.subr.mxu0 0.0
  %399 = vmatpush1.msra.mxu0 0.0
  %400 = vmatprep.subr.mxu0 0.0
  %401 = vmatpush1.msra.mxu0 0.0
  %402 = vmatprep.subr.mxu0 0.0
  %403 = vmatpush1.msra.mxu0 0.0
  %404 = vmatprep.subr.mxu0 0.0
  %405 = vmatpush1.msra.mxu0 0.0
  %406 = vmatprep.subr.mxu0 0.0
  %407 = vmatpush1.msra.mxu0 0.0
  %408 = vmatprep.subr.mxu0 0.0
  %409 = vmatpush1.msra.mxu0 0.0
  %410 = vmatprep.subr.mxu0 0.0
  %411 = vmatpush1.msra.mxu0 0.0
  %412 = vmatprep.subr.mxu0 0.0
  %413 = vmatpush1.msra.mxu0 0.0
  %414 = vmatprep.mubr.f32.mxu0 0.0
  %415 = vmatmul.mubr.f32.gmra.mrb[0].mxu0 %v299
  %v416 = vpop.f32.mrb[0].mxu0
  %v417 = vadd.f32 0.0, %v416
  %v418 = vpop.f32.mrb[0].mxu0
  %419 = vmatprep.mubr.f32.mxu0 0.0
  %420 = vmatmul.mubr.f32.gmra.mrb[0].mxu0 %v302
  %v421 = vpop.f32.mrb[0].mxu0
  %v422 = vadd.f32 0.0, %v421
  %v423 = vpop.f32.mrb[0].mxu0
  %424 = vmatprep.mubr.f32.mxu0 0.0
  %425 = vmatmul.mubr.f32.gmra.mrb[0].mxu0 %v305
  %v426 = vpop.f32.mrb[0].mxu0
  %v427 = vadd.f32 0.0, %v426
  %v428 = vpop.f32.mrb[0].mxu0
  %429 = vmatprep.mubr.f32.mxu0 0.0
  %430 = vmatmul.mubr.f32.gmra.mrb[0].mxu0 %v308
  %v431 = vpop.f32.mrb[0].mxu0
  %v432 = vadd.f32 0.0, %v431
  %v433 = vpop.f32.mrb[0].mxu0
  %434 = vmatprep.mubr.f32.mxu0 0.0
  %435 = vmatmul.mubr.f32.gmra.mrb[0].mxu0 %v311
  %v436 = vpop.f32.mrb[0].mxu0
  %v437 = vadd.f32 0.0, %v436
  %v438 = vpop.f32.mrb[0].mxu0
  %439 = vmatprep.mubr.f32.mxu0 0.0
  %440 = vmatmul.mubr.f32.gmra.mrb[0].mxu0 %v314
  %v441 = vpop.f32.mrb[0].mxu0
  %v442 = vadd.f32 0.0, %v441
  %v443 = vpop.f32.mrb[0].mxu0
  %444 = vmatprep.mubr.f32.mxu0 0.0
  %445 = vmatmul.mubr.f32.gmra.mrb[0].mxu0 %v317
  %v446 = vpop.f32.mrb[0].mxu0
  %v447 = vadd.f32 0.0, %v446
  %v448 = vpop.f32.mrb[0].mxu0
  %449 = vmatprep.mubr.f32.mxu0 0.0
  %450 = vmatmul.mubr.f32.gmra.mrb[0].mxu0 %v320
  %v451 = vpop.f32.mrb[0].mxu0
  %v452 = vadd.f32 0.0, %v451
  %v453 = vpop.f32.mrb[0].mxu0
  %454 = vmatprep.mubr.f32.mxu0 0.0
  %455 = vmatmul.mubr.f32.gmra.mrb[0].mxu0 %v323
  %v456 = vpop.f32.mrb[0].mxu0
  %v457 = vadd.f32 0.0, %v456
  %v458 = vpop.f32.mrb[0].mxu0
  %459 = vmatprep.mubr.f32.mxu0 0.0
  %460 = vmatmul.mubr.f32.gmra.mrb[0].mxu0 %v326
  %v461 = vpop.f32.mrb[0].mxu0
  %v462 = vadd.f32 0.0, %v461
  %v463 = vpop.f32.mrb[0].mxu0
  %464 = vmatprep.mubr.f32.mxu0 0.0
  %465 = vmatmul.mubr.f32.gmra.mrb[0].mxu0 %v329
  %v466 = vpop.f32.mrb[0].mxu0
  %v467 = vadd.f32 0.0, %v466
  %v468 = vpop.f32.mrb[0].mxu0
  %469 = vmatprep.mubr.f32.mxu0 0.0
  %470 = vmatmul.mubr.f32.gmra.mrb[0].mxu0 %v332
  %v471 = vpop.f32.mrb[0].mxu0
  %v472 = vadd.f32 0.0, %v471
  %v473 = vpop.f32.mrb[0].mxu0
  %474 = vmatprep.mubr.f32.mxu0 0.0
  %475 = vmatmul.mubr.f32.gmra.mrb[0].mxu0 %v335
  %v476 = vpop.f32.mrb[0].mxu0
  %v477 = vadd.f32 0.0, %v476
  %v478 = vpop.f32.mrb[0].mxu0
  %479 = vmatprep.mubr.f32.mxu0 0.0
  %480 = vmatmul.mubr.f32.gmra.mrb[0].mxu0 %v338
  %v481 = vpop.f32.mrb[0].mxu0
  %v482 = vadd.f32 0.0, %v481
  %v483 = vpop.f32.mrb[0].mxu0
  %484 = vmatprep.mubr.f32.mxu0 0.0
  %485 = vmatmul.mubr.f32.gmra.mrb[0].mxu0 %v341
  %v486 = vpop.f32.mrb[0].mxu0
  %v487 = vadd.f32 0.0, %v486
  %v488 = vpop.f32.mrb[0].mxu0
  %489 = vmatprep.mubr.f32.mxu0 0.0
  %490 = vmatmul.mubr.f32.gmra.mrb[0].mxu0 %v344
  %v491 = vpop.f32.mrb[0].mxu0
  %v492 = vadd.f32 0.0, %v491
  %v493 = vpop.f32.mrb[0].mxu0
  %494 = vdwg.mxu0
  %vm495 = vcmask 261120
  %496 = vst.msk [vmem:[%s8] sm:$0xff] %vm495, %v417
  %497 = vst.msk [vmem:[%s8 + $0x8] sm:$0xff] %vm495, %v422
  %498 = vst.msk [vmem:[%s8 + $0x10] sm:$0xff] %vm495, %v427
  %499 = vst.msk [vmem:[%s8 + $0x18] sm:$0xff] %vm495, %v432
  %500 = vst.msk [vmem:[%s8 + $0x20] sm:$0xff] %vm495, %v437
  %501 = vst.msk [vmem:[%s8 + $0x28] sm:$0xff] %vm495, %v442
  %502 = vst.msk [vmem:[%s8 + $0x30] sm:$0xff] %vm495, %v447
  %503 = vst.msk [vmem:[%s8 + $0x38] sm:$0xff] %vm495, %v452
  %504 = vst.msk [vmem:[%s8 + $0x40] sm:$0xff] %vm495, %v457
  %505 = vst.msk [vmem:[%s8 + $0x48] sm:$0xff] %vm495, %v462
  %506 = vst.msk [vmem:[%s8 + $0x50] sm:$0xff] %vm495, %v467
  %507 = vst.msk [vmem:[%s8 + $0x58] sm:$0xff] %vm495, %v472
  %508 = vst.msk [vmem:[%s8 + $0x60] sm:$0xff] %vm495, %v477
  %509 = vst.msk [vmem:[%s8 + $0x68] sm:$0xff] %vm495, %v482
  %510 = vst.msk [vmem:[%s8 + $0x70] sm:$0xff] %vm495, %v487
  %511 = vst.msk [vmem:[%s8 + $0x78] sm:$0xff] %vm495, %v492
  %528 = vrot.lane.b32.xlu0 %v417, 96
  %v529 = vpop.permute.xlu0 %528
  %530 = vrot.lane.b32.xlu0 %v422, 96
  %v531 = vpop.permute.xlu0 %530
  %532 = vrot.lane.b32.xlu0 %v427, 96
  %v533 = vpop.permute.xlu0 %532
  %534 = vrot.lane.b32.xlu0 %v432, 96
  %v535 = vpop.permute.xlu0 %534
  %536 = vrot.lane.b32.xlu0 %v437, 96
  %v537 = vpop.permute.xlu0 %536
  %538 = vrot.lane.b32.xlu0 %v442, 96
  %v539 = vpop.permute.xlu0 %538
  %540 = vrot.lane.b32.xlu0 %v447, 96
  %v541 = vpop.permute.xlu0 %540
  %542 = vrot.lane.b32.xlu0 %v452, 96
  %v543 = vpop.permute.xlu0 %542
  %544 = vrot.lane.b32.xlu0 %v457, 96
  %v545 = vpop.permute.xlu0 %544
  %546 = vrot.lane.b32.xlu0 %v462, 96
  %v547 = vpop.permute.xlu0 %546
  %548 = vrot.lane.b32.xlu0 %v467, 96
  %v549 = vpop.permute.xlu0 %548
  %550 = vrot.lane.b32.xlu0 %v472, 96
  %v551 = vpop.permute.xlu0 %550
  %552 = vrot.lane.b32.xlu0 %v477, 96
  %v553 = vpop.permute.xlu0 %552
  %554 = vrot.lane.b32.xlu0 %v482, 96
  %v555 = vpop.permute.xlu0 %554
  %556 = vrot.lane.b32.xlu0 %v487, 96
  %v557 = vpop.permute.xlu0 %556
  %558 = vrot.lane.b32.xlu0 %v492, 96
  %v559 = vpop.permute.xlu0 %558
  %576 = vst.msk [vmem:[%s9] sm:$0xff] %vm495, %v529
  %577 = vst.msk [vmem:[%s9 + $0x8] sm:$0xff] %vm495, %v531
  %578 = vst.msk [vmem:[%s9 + $0x10] sm:$0xff] %vm495, %v533
  %579 = vst.msk [vmem:[%s9 + $0x18] sm:$0xff] %vm495, %v535
  %580 = vst.msk [vmem:[%s9 + $0x20] sm:$0xff] %vm495, %v537
  %581 = vst.msk [vmem:[%s9 + $0x28] sm:$0xff] %vm495, %v539
  %582 = vst.msk [vmem:[%s9 + $0x30] sm:$0xff] %vm495, %v541
  %583 = vst.msk [vmem:[%s9 + $0x38] sm:$0xff] %vm495, %v543
  %584 = vst.msk [vmem:[%s9 + $0x40] sm:$0xff] %vm495, %v545
  %585 = vst.msk [vmem:[%s9 + $0x48] sm:$0xff] %vm495, %v547
  %586 = vst.msk [vmem:[%s9 + $0x50] sm:$0xff] %vm495, %v549
  %587 = vst.msk [vmem:[%s9 + $0x58] sm:$0xff] %vm495, %v551
  %588 = vst.msk [vmem:[%s9 + $0x60] sm:$0xff] %vm495, %v553
  %589 = vst.msk [vmem:[%s9 + $0x68] sm:$0xff] %vm495, %v555
  %590 = vst.msk [vmem:[%s9 + $0x70] sm:$0xff] %vm495, %v557
  %591 = vst.msk [vmem:[%s9 + $0x78] sm:$0xff] %vm495, %v559
  %v593 = vsel %vm495, %v33, 0
  %v595 = vsel %vm495, %v417, 0
  %v597 = vsel %vm495, %v422, 0
  %v599 = vsel %vm495, %v427, 0
  %v601 = vsel %vm495, %v432, 0
  %v603 = vsel %vm495, %v437, 0
  %v605 = vsel %vm495, %v442, 0
  %v607 = vsel %vm495, %v447, 0
  %v609 = vsel %vm495, %v452, 0
  %v611 = vsel %vm495, %v457, 0
  %v613 = vsel %vm495, %v462, 0
  %v615 = vsel %vm495, %v467, 0
  %v617 = vsel %vm495, %v472, 0
  %v619 = vsel %vm495, %v477, 0
  %v621 = vsel %vm495, %v482, 0
  %v623 = vsel %vm495, %v487, 0
  %v625 = vsel %vm495, %v492, 0
  %627 = vmatprep.subr.mxu0 0.0
  %628 = vmatpush1.xpose.msra.mxu0 %v595
  %629 = vmatprep.subr.mxu0 0.0
  %630 = vmatpush1.xpose.msra.mxu0 %v597
  %631 = vmatprep.subr.mxu0 0.0
  %632 = vmatpush1.xpose.msra.mxu0 %v599
  %633 = vmatprep.subr.mxu0 0.0
  %634 = vmatpush1.xpose.msra.mxu0 %v601
  %635 = vmatprep.subr.mxu0 0.0
  %636 = vmatpush1.xpose.msra.mxu0 %v603
  %637 = vmatprep.subr.mxu0 0.0
  %638 = vmatpush1.xpose.msra.mxu0 %v605
  %639 = vmatprep.subr.mxu0 0.0
  %640 = vmatpush1.xpose.msra.mxu0 %v607
  %641 = vmatprep.subr.mxu0 0.0
  %642 = vmatpush1.xpose.msra.mxu0 %v609
  %643 = vmatprep.subr.mxu0 0.0
  %644 = vmatpush1.xpose.msra.mxu0 %v611
  %645 = vmatprep.subr.mxu0 0.0
  %646 = vmatpush1.xpose.msra.mxu0 %v613
  %647 = vmatprep.subr.mxu0 0.0
  %648 = vmatpush1.xpose.msra.mxu0 %v615
  %649 = vmatprep.subr.mxu0 0.0
  %650 = vmatpush1.xpose.msra.mxu0 %v617
  %651 = vmatprep.subr.mxu0 0.0
  %652 = vmatpush1.xpose.msra.mxu0 %v619
  %653 = vmatprep.subr.mxu0 0.0
  %654 = vmatpush1.xpose.msra.mxu0 %v621
  %655 = vmatprep.subr.mxu0 0.0
  %656 = vmatpush1.xpose.msra.mxu0 %v623
  %657 = vmatprep.subr.mxu0 0.0
  %658 = vmatpush1.xpose.msra.mxu0 %v625
  %659 = vmatprep.subr.mxu0 0.0
  %660 = vmatpush1.xpose.msra.mxu0 0.0
  %661 = vmatprep.subr.mxu0 0.0
  %662 = vmatpush1.xpose.msra.mxu0 0.0
  %663 = vmatprep.subr.mxu0 0.0
  %664 = vmatpush1.xpose.msra.mxu0 0.0
  %665 = vmatprep.subr.mxu0 0.0
  %666 = vmatpush1.xpose.msra.mxu0 0.0
  %667 = vmatprep.subr.mxu0 0.0
  %668 = vmatpush1.xpose.msra.mxu0 0.0
  %669 = vmatprep.subr.mxu0 0.0
  %670 = vmatpush1.xpose.msra.mxu0 0.0
  %671 = vmatprep.subr.mxu0 0.0
  %672 = vmatpush1.xpose.msra.mxu0 0.0
  %673 = vmatprep.subr.mxu0 0.0
  %674 = vmatpush1.xpose.msra.mxu0 0.0
  %675 = vmatprep.subr.mxu0 0.0
  %676 = vmatpush1.xpose.msra.mxu0 0.0
  %677 = vmatprep.subr.mxu0 0.0
  %678 = vmatpush1.xpose.msra.mxu0 0.0
  %679 = vmatprep.subr.mxu0 0.0
  %680 = vmatpush1.xpose.msra.mxu0 0.0
  %681 = vmatprep.subr.mxu0 0.0
  %682 = vmatpush1.xpose.msra.mxu0 0.0
  %683 = vmatprep.subr.mxu0 0.0
  %684 = vmatpush1.xpose.msra.mxu0 0.0
  %685 = vmatprep.subr.mxu0 0.0
  %686 = vmatpush1.xpose.msra.mxu0 0.0
  %687 = vmatprep.subr.mxu0 0.0
  %688 = vmatpush1.xpose.msra.mxu0 0.0
  %689 = vmatprep.subr.mxu0 0.0
  %690 = vmatpush1.xpose.msra.mxu0 0.0
  %691 = vmatprep.mubr.f32.mxu0 0.0
  %692 = vmatmul.mubr.f32.gmra.mrb[0].mxu0 %v593
  %v693 = vpop.f32.mrb[0].mxu0
  %v694 = vadd.f32 0.0, %v693
  %v695 = vpop.f32.mrb[0].mxu0
  %696 = vdwg.mxu0
  %697 = vst [vmem:[%s10] sm:$0x1] %v694
  // Predicated region
  $region30: #{dual_branch_gnn_forward.2} parent=0 // pred_check
    _
  $region31: #{dual_branch_gnn_forward.2} parent=0 // pred_check_branch
    %699 = sbr.rel (0) target = $region33
  $region32: #{dual_branch_gnn_forward.2} parent=0 // pred_region
    _
  $region33: #{dual_branch_gnn_forward.2} parent=0 // pred_fallthru
    _
  // Predicated region
  $region34: #{dual_branch_gnn_forward.2} parent=0 // pred_check
    _
  $region35: #{dual_branch_gnn_forward.2} parent=0 // pred_check_branch
    %701 = sbr.rel (0) target = $region37
  $region36: #{dual_branch_gnn_forward.2} parent=0 // pred_region
    _
  $region37: #{dual_branch_gnn_forward.2} parent=0 // pred_fallthru
    _
  // Predicated region
  $region38: #{dual_branch_gnn_forward.2} parent=0 // pred_check
    _
  $region39: #{dual_branch_gnn_forward.2} parent=0 // pred_check_branch
    %703 = sbr.rel (0) target = $region41
  $region40: #{dual_branch_gnn_forward.2} parent=0 // pred_region
    _
  $region41: #{dual_branch_gnn_forward.2} parent=0 // pred_fallthru
    _
  // Predicated region
  $region42: #{dual_branch_gnn_forward.2} parent=0 // pred_check
    _
  $region43: #{dual_branch_gnn_forward.2} parent=0 // pred_check_branch
    %705 = sbr.rel (0) target = $region45
  $region44: #{dual_branch_gnn_forward.2} parent=0 // pred_region
    _
  $region45: #{dual_branch_gnn_forward.2} parent=0 // pred_fallthru
    _
  // Predicated region
  $region46: #{dual_branch_gnn_forward.2} parent=0 // pred_check
    _
  $region47: #{dual_branch_gnn_forward.2} parent=0 // pred_check_branch
    %707 = sbr.rel (0) target = $region49
  $region48: #{dual_branch_gnn_forward.2} parent=0 // pred_region
    _
  $region49: #{dual_branch_gnn_forward.2} parent=0 // pred_fallthru
    _
  // Predicated region
  $region50: #{dual_branch_gnn_forward.2} parent=0 // pred_check
    _
  $region51: #{dual_branch_gnn_forward.2} parent=0 // pred_check_branch
    %709 = sbr.rel (0) target = $region53
  $region52: #{dual_branch_gnn_forward.2} parent=0 // pred_region
    _
  $region53: #{dual_branch_gnn_forward.2} parent=0 // pred_fallthru
    _
  // Predicated region
  $region54: #{dual_branch_gnn_forward.2} parent=0 // pred_check
    _
  $region55: #{dual_branch_gnn_forward.2} parent=0 // pred_check_branch
    %711 = sbr.rel (0) target = $region57
  $region56: #{dual_branch_gnn_forward.2} parent=0 // pred_region
    _
  $region57: #{dual_branch_gnn_forward.2} parent=0 // pred_fallthru
    _
  // Predicated region
  $region58: #{dual_branch_gnn_forward.2} parent=0 // pred_check
    _
  $region59: #{dual_branch_gnn_forward.2} parent=0 // pred_check_branch
    %713 = sbr.rel (0) target = $region61
  $region60: #{dual_branch_gnn_forward.2} parent=0 // pred_region
    _
  $region61: #{dual_branch_gnn_forward.2} parent=0 // pred_fallthru
    _

// kernel: dual_branch_gnn_forward.3
$region0: #{dual_branch_gnn_forward.3}
  #allocation0 [shape = 'u32[]', space=smem, size = 0x4, offset = 0x4, fixed_abs, tag = 'smem constant byte address 0x4 - core index']
  #allocation1 [shape = 'u32[144,128]{1,0:T(1,128)}', space=vmem, size = 0x12000, scoped, tag = 'internal scratch']
  %s0 = inlined_call_operand.vmem [shape: f32[128,128], index: 0, kind: input, shape index: {}]
  %s1 = inlined_call_operand.vmem [shape: f32[128,32], index: 1, kind: input, shape index: {}]
  %s2 = inlined_call_operand.vmem [shape: f32[128,32], index: 2, kind: input, shape index: {}]
  %s3 = inlined_call_operand.vmem [shape: f32[1,128], index: 3, kind: input, shape index: {}]
  %s4 = inlined_call_operand.vmem [shape: f32[1,128], index: 4, kind: input, shape index: {}]
  %s5 = inlined_call_operand.vmem [shape: f32[7,32], index: 5, kind: input, shape index: {}]
  %s6 = inlined_call_operand.vmem [shape: f32[64,32], index: 6, kind: input, shape index: {}]
  %s7 = inlined_call_operand.vmem [shape: f32[1,128], index: 7, kind: output, shape index: {}]
  %s8 = sld [smem:[#allocation0]]
  $region38: #{dual_branch_gnn_forward.3} parent=0
    _
  %s10 = ssub.s32 1, %s8
  %s11 = scalar_select 0, %s10, %s8
  // Predicated region
  $region2: #{dual_branch_gnn_forward.3} parent=0 // pred_check
    _
  $region3: #{dual_branch_gnn_forward.3} parent=0 // pred_check_branch
    %13 = sbr.rel (0) target = $region5
  $region4: #{dual_branch_gnn_forward.3} parent=0 // pred_region
    _
  $region5: #{dual_branch_gnn_forward.3} parent=0 // pred_fallthru
    _
  // Predicated region
  $region6: #{dual_branch_gnn_forward.3} parent=0 // pred_check
    _
  $region7: #{dual_branch_gnn_forward.3} parent=0 // pred_check_branch
    %15 = sbr.rel (0) target = $region9
  $region8: #{dual_branch_gnn_forward.3} parent=0 // pred_region
    _
  $region9: #{dual_branch_gnn_forward.3} parent=0 // pred_fallthru
    _
  // Predicated region
  $region10: #{dual_branch_gnn_forward.3} parent=0 // pred_check
    _
  $region11: #{dual_branch_gnn_forward.3} parent=0 // pred_check_branch
    %17 = sbr.rel (0) target = $region13
  $region12: #{dual_branch_gnn_forward.3} parent=0 // pred_region
    _
  $region13: #{dual_branch_gnn_forward.3} parent=0 // pred_fallthru
    _
  // Predicated region
  $region14: #{dual_branch_gnn_forward.3} parent=0 // pred_check
    _
  $region15: #{dual_branch_gnn_forward.3} parent=0 // pred_check_branch
    %19 = sbr.rel (0) target = $region17
  $region16: #{dual_branch_gnn_forward.3} parent=0 // pred_region
    _
  $region17: #{dual_branch_gnn_forward.3} parent=0 // pred_fallthru
    _
  // Predicated region
  $region18: #{dual_branch_gnn_forward.3} parent=0 // pred_check
    _
  $region19: #{dual_branch_gnn_forward.3} parent=0 // pred_check_branch
    %21 = sbr.rel (0) target = $region21
  $region20: #{dual_branch_gnn_forward.3} parent=0 // pred_region
    _
  $region21: #{dual_branch_gnn_forward.3} parent=0 // pred_fallthru
    _
  // Predicated region
  $region22: #{dual_branch_gnn_forward.3} parent=0 // pred_check
    _
  $region23: #{dual_branch_gnn_forward.3} parent=0 // pred_check_branch
    %23 = sbr.rel (0) target = $region25
  $region24: #{dual_branch_gnn_forward.3} parent=0 // pred_region
    _
  $region25: #{dual_branch_gnn_forward.3} parent=0 // pred_fallthru
    _
  // Predicated region
  $region26: #{dual_branch_gnn_forward.3} parent=0 // pred_check
    _
  $region27: #{dual_branch_gnn_forward.3} parent=0 // pred_check_branch
    %25 = sbr.rel (0) target = $region29
  $region28: #{dual_branch_gnn_forward.3} parent=0 // pred_region
    _
  $region29: #{dual_branch_gnn_forward.3} parent=0 // pred_fallthru
    _
  %s27 = smul.u32 0, 128
  %v28 = vld [vmem:[%s5 + $0x1] sm:$0x1]
  %v29 = vld [vmem:[%s5 + $0x2] sm:$0x1]
  %v30 = vld [vmem:[%s5 + $0x3] sm:$0x1]
  %v31 = vld [vmem:[%s5 + $0x4] sm:$0x1]
  %v32 = vld [vmem:[%s5 + $0x5] sm:$0x1]
  %v33 = vld [vmem:[%s5 + $0x6] sm:$0x1]
  %v34 = vld [vmem:[%s0] sm:$0xff]
  %v35 = vld [vmem:[%s0 + $0x8] sm:$0xff]
  %v36 = vld [vmem:[%s0 + $0x10] sm:$0xff]
  %v37 = vld [vmem:[%s0 + $0x18] sm:$0xff]
  %v38 = vld [vmem:[%s0 + $0x20] sm:$0xff]
  %v39 = vld [vmem:[%s0 + $0x28] sm:$0xff]
  %v40 = vld [vmem:[%s0 + $0x30] sm:$0xff]
  %v41 = vld [vmem:[%s0 + $0x38] sm:$0xff]
  %v42 = vld [vmem:[%s0 + $0x40] sm:$0xff]
  %v43 = vld [vmem:[%s0 + $0x48] sm:$0xff]
  %v44 = vld [vmem:[%s0 + $0x50] sm:$0xff]
  %v45 = vld [vmem:[%s0 + $0x58] sm:$0xff]
  %v46 = vld [vmem:[%s0 + $0x60] sm:$0xff]
  %v47 = vld [vmem:[%s0 + $0x68] sm:$0xff]
  %v48 = vld [vmem:[%s0 + $0x70] sm:$0xff]
  %v49 = vld [vmem:[%s0 + $0x78] sm:$0xff]
  %vm50 = vcmp.gt.f32.partialorder %v34, 0.0
  %vm51 = vcmp.gt.f32.partialorder %v35, 0.0
  %vm52 = vcmp.gt.f32.partialorder %v36, 0.0
  %vm53 = vcmp.gt.f32.partialorder %v37, 0.0
  %vm54 = vcmp.gt.f32.partialorder %v38, 0.0
  %vm55 = vcmp.gt.f32.partialorder %v39, 0.0
  %vm56 = vcmp.gt.f32.partialorder %v40, 0.0
  %vm57 = vcmp.gt.f32.partialorder %v41, 0.0
  %vm58 = vcmp.gt.f32.partialorder %v42, 0.0
  %vm59 = vcmp.gt.f32.partialorder %v43, 0.0
  %vm60 = vcmp.gt.f32.partialorder %v44, 0.0
  %vm61 = vcmp.gt.f32.partialorder %v45, 0.0
  %vm62 = vcmp.gt.f32.partialorder %v46, 0.0
  %vm63 = vcmp.gt.f32.partialorder %v47, 0.0
  %vm64 = vcmp.gt.f32.partialorder %v48, 0.0
  %vm65 = vcmp.gt.f32.partialorder %v49, 0.0
  %66 = vadd.xlane.f32.xlu0 %v34
  %v67 = vpop.xlane.xlu0 %66
  %68 = vadd.xlane.f32.xlu0 %v35
  %v69 = vpop.xlane.xlu0 %68
  %70 = vadd.xlane.f32.xlu0 %v36
  %v71 = vpop.xlane.xlu0 %70
  %72 = vadd.xlane.f32.xlu0 %v37
  %v73 = vpop.xlane.xlu0 %72
  %74 = vadd.xlane.f32.xlu0 %v38
  %v75 = vpop.xlane.xlu0 %74
  %76 = vadd.xlane.f32.xlu0 %v39
  %v77 = vpop.xlane.xlu0 %76
  %78 = vadd.xlane.f32.xlu0 %v40
  %v79 = vpop.xlane.xlu0 %78
  %80 = vadd.xlane.f32.xlu0 %v41
  %v81 = vpop.xlane.xlu0 %80
  %82 = vadd.xlane.f32.xlu0 %v42
  %v83 = vpop.xlane.xlu0 %82
  %84 = vadd.xlane.f32.xlu0 %v43
  %v85 = vpop.xlane.xlu0 %84
  %86 = vadd.xlane.f32.xlu0 %v44
  %v87 = vpop.xlane.xlu0 %86
  %88 = vadd.xlane.f32.xlu0 %v45
  %v89 = vpop.xlane.xlu0 %88
  %90 = vadd.xlane.f32.xlu0 %v46
  %v91 = vpop.xlane.xlu0 %90
  %92 = vadd.xlane.f32.xlu0 %v47
  %v93 = vpop.xlane.xlu0 %92
  %94 = vadd.xlane.f32.xlu0 %v48
  %v95 = vpop.xlane.xlu0 %94
  %96 = vadd.xlane.f32.xlu0 %v49
  %v97 = vpop.xlane.xlu0 %96
  %v98 = vrsqrt.pop %v67
  %v99 = vrsqrt.pop %v69
  %v100 = vrsqrt.pop %v71
  %v101 = vrsqrt.pop %v73
  %v102 = vrsqrt.pop %v75
  %v103 = vrsqrt.pop %v77
  %v104 = vrsqrt.pop %v79
  %v105 = vrsqrt.pop %v81
  %v106 = vrsqrt.pop %v83
  %v107 = vrsqrt.pop %v85
  %v108 = vrsqrt.pop %v87
  %v109 = vrsqrt.pop %v89
  %v110 = vrsqrt.pop %v91
  %v111 = vrsqrt.pop %v93
  %v112 = vrsqrt.pop %v95
  %v113 = vrsqrt.pop %v97
  %v114 = vmul.f32 %v98, %v34
  %v115 = vmul.f32 %v99, %v35
  %v116 = vmul.f32 %v100, %v36
  %v117 = vmul.f32 %v101, %v37
  %v118 = vmul.f32 %v102, %v38
  %v119 = vmul.f32 %v103, %v39
  %v120 = vmul.f32 %v104, %v40
  %v121 = vmul.f32 %v105, %v41
  %v122 = vmul.f32 %v106, %v42
  %v123 = vmul.f32 %v107, %v43
  %v124 = vmul.f32 %v108, %v44
  %v125 = vmul.f32 %v109, %v45
  %v126 = vmul.f32 %v110, %v46
  %v127 = vmul.f32 %v111, %v47
  %v128 = vmul.f32 %v112, %v48
  %v129 = vmul.f32 %v113, %v49
  %v130 = vld [vmem:[%s4] sm:$0x1]
  %v131 = vrsqrt.pop %v130
  %v133 = vlaneseq
  %v134 = vshrl.u32 %v133, 7
  %v135 = vsub.s32 0, %v134
  %v136 = vrot.slane %v131, %v135
  %v138 = vmul.f32 %v114, %v136
  %v139 = vmul.f32 %v115, %v136
  %v140 = vmul.f32 %v116, %v136
  %v141 = vmul.f32 %v117, %v136
  %v142 = vmul.f32 %v118, %v136
  %v143 = vmul.f32 %v119, %v136
  %v144 = vmul.f32 %v120, %v136
  %v145 = vmul.f32 %v121, %v136
  %v146 = vmul.f32 %v122, %v136
  %v147 = vmul.f32 %v123, %v136
  %v148 = vmul.f32 %v124, %v136
  %v149 = vmul.f32 %v125, %v136
  %v150 = vmul.f32 %v126, %v136
  %v151 = vmul.f32 %v127, %v136
  %v152 = vmul.f32 %v128, %v136
  %v153 = vmul.f32 %v129, %v136
  %v154 = vpack.c.bf16 %v139, %v138
  %v155 = vpack.c.bf16 %v141, %v140
  %v156 = vpack.c.bf16 %v143, %v142
  %v157 = vpack.c.bf16 %v145, %v144
  %v158 = vpack.c.bf16 %v147, %v146
  %v159 = vpack.c.bf16 %v149, %v148
  %v160 = vpack.c.bf16 %v151, %v150
  %v161 = vpack.c.bf16 %v153, %v152
  %v162 = vld [vmem:[%s2] sm:$0xff]
  %v163 = vld [vmem:[%s2 + $0x8] sm:$0xff]
  %v164 = vld [vmem:[%s2 + $0x10] sm:$0xff]
  %v165 = vld [vmem:[%s2 + $0x18] sm:$0xff]
  %v166 = vld [vmem:[%s2 + $0x20] sm:$0xff]
  %v167 = vld [vmem:[%s2 + $0x28] sm:$0xff]
  %v168 = vld [vmem:[%s2 + $0x30] sm:$0xff]
  %v169 = vld [vmem:[%s2 + $0x38] sm:$0xff]
  %v170 = vld [vmem:[%s2 + $0x40] sm:$0xff]
  %v171 = vld [vmem:[%s2 + $0x48] sm:$0xff]
  %v172 = vld [vmem:[%s2 + $0x50] sm:$0xff]
  %v173 = vld [vmem:[%s2 + $0x58] sm:$0xff]
  %v174 = vld [vmem:[%s2 + $0x60] sm:$0xff]
  %v175 = vld [vmem:[%s2 + $0x68] sm:$0xff]
  %v176 = vld [vmem:[%s2 + $0x70] sm:$0xff]
  %v177 = vld [vmem:[%s2 + $0x78] sm:$0xff]
  %v178 = vpack.c.bf16 %v163, %v162
  %v179 = vpack.c.bf16 %v165, %v164
  %v180 = vpack.c.bf16 %v167, %v166
  %v181 = vpack.c.bf16 %v169, %v168
  %v182 = vpack.c.bf16 %v171, %v170
  %v183 = vpack.c.bf16 %v173, %v172
  %v184 = vpack.c.bf16 %v175, %v174
  %v185 = vpack.c.bf16 %v177, %v176
  %v186 = vlaneseq
  %v187 = vshrl.u32 %v186, 7
  %v188 = vsub.s32 0, %v187
  %v189 = vrot.slane %v30, %v188
  %190 = vmatprep.subr.bf16.mxu0 0
  %191 = vmatpush1.bf16.msra.mxu0 %v178
  %192 = vmatprep.subr.bf16.mxu0 0
  %193 = vmatpush1.bf16.msra.mxu0 %v179
  %194 = vmatprep.subr.bf16.mxu0 0
  %195 = vmatpush1.bf16.msra.mxu0 %v180
  %196 = vmatprep.subr.bf16.mxu0 0
  %197 = vmatpush1.bf16.msra.mxu0 %v181
  %198 = vmatprep.subr.bf16.mxu0 0
  %199 = vmatpush1.bf16.msra.mxu0 %v182
  %200 = vmatprep.subr.bf16.mxu0 0
  %201 = vmatpush1.bf16.msra.mxu0 %v183
  %202 = vmatprep.subr.bf16.mxu0 0
  %203 = vmatpush1.bf16.msra.mxu0 %v184
  %204 = vmatprep.subr.bf16.mxu0 0
  %205 = vmatpush1.bf16.msra.mxu0 %v185
  %206 = vmatprep.subr.bf16.mxu0 0
  %207 = vmatpush1.bf16.msra.mxu0 0
  %208 = vmatprep.subr.bf16.mxu0 0
  %209 = vmatpush1.bf16.msra.mxu0 0
  %210 = vmatprep.subr.bf16.mxu0 0
  %211 = vmatpush1.bf16.msra.mxu0 0
  %212 = vmatprep.subr.bf16.mxu0 0
  %213 = vmatpush1.bf16.msra.mxu0 0
  %214 = vmatprep.subr.bf16.mxu0 0
  %215 = vmatpush1.bf16.msra.mxu0 0
  %216 = vmatprep.subr.bf16.mxu0 0
  %217 = vmatpush1.bf16.msra.mxu0 0
  %218 = vmatprep.subr.bf16.mxu0 0
  %219 = vmatpush1.bf16.msra.mxu0 0
  %220 = vmatprep.subr.bf16.mxu0 0
  %221 = vmatpush1.bf16.msra.mxu0 0
  %222 = vmatprep.mubr.bf16.mxu0 0
  %223 = vmatmul.mubr.bf16.gmra.mrb[0].mxu0 %v154
  %v224 = vpop.f32.mrb[0].mxu0
  %v225 = vadd.f32 %v189, %v224
  %v226 = vpop.f32.mrb[0].mxu0
  %v227 = vpop.f32.mrb[0].mxu0
  %v228 = vadd.f32 %v189, %v227
  %v229 = vpop.f32.mrb[0].mxu0
  %230 = vmatprep.mubr.bf16.mxu0 0
  %231 = vmatmul.mubr.bf16.gmra.mrb[0].mxu0 %v155
  %v232 = vpop.f32.mrb[0].mxu0
  %v233 = vadd.f32 %v189, %v232
  %v234 = vpop.f32.mrb[0].mxu0
  %v235 = vpop.f32.mrb[0].mxu0
  %v236 = vadd.f32 %v189, %v235
  %v237 = vpop.f32.mrb[0].mxu0
  %238 = vmatprep.mubr.bf16.mxu0 0
  %239 = vmatmul.mubr.bf16.gmra.mrb[0].mxu0 %v156
  %v240 = vpop.f32.mrb[0].mxu0
  %v241 = vadd.f32 %v189, %v240
  %v242 = vpop.f32.mrb[0].mxu0
  %v243 = vpop.f32.mrb[0].mxu0
  %v244 = vadd.f32 %v189, %v243
  %v245 = vpop.f32.mrb[0].mxu0
  %246 = vmatprep.mubr.bf16.mxu0 0
  %247 = vmatmul.mubr.bf16.gmra.mrb[0].mxu0 %v157
  %v248 = vpop.f32.mrb[0].mxu0
  %v249 = vadd.f32 %v189, %v248
  %v250 = vpop.f32.mrb[0].mxu0
  %v251 = vpop.f32.mrb[0].mxu0
  %v252 = vadd.f32 %v189, %v251
  %v253 = vpop.f32.mrb[0].mxu0
  %254 = vmatprep.mubr.bf16.mxu0 0
  %255 = vmatmul.mubr.bf16.gmra.mrb[0].mxu0 %v158
  %v256 = vpop.f32.mrb[0].mxu0
  %v257 = vadd.f32 %v189, %v256
  %v258 = vpop.f32.mrb[0].mxu0
  %v259 = vpop.f32.mrb[0].mxu0
  %v260 = vadd.f32 %v189, %v259
  %v261 = vpop.f32.mrb[0].mxu0
  %262 = vmatprep.mubr.bf16.mxu0 0
  %263 = vmatmul.mubr.bf16.gmra.mrb[0].mxu0 %v159
  %v264 = vpop.f32.mrb[0].mxu0
  %v265 = vadd.f32 %v189, %v264
  %v266 = vpop.f32.mrb[0].mxu0
  %v267 = vpop.f32.mrb[0].mxu0
  %v268 = vadd.f32 %v189, %v267
  %v269 = vpop.f32.mrb[0].mxu0
  %270 = vmatprep.mubr.bf16.mxu0 0
  %271 = vmatmul.mubr.bf16.gmra.mrb[0].mxu0 %v160
  %v272 = vpop.f32.mrb[0].mxu0
  %v273 = vadd.f32 %v189, %v272
  %v274 = vpop.f32.mrb[0].mxu0
  %v275 = vpop.f32.mrb[0].mxu0
  %v276 = vadd.f32 %v189, %v275
  %v277 = vpop.f32.mrb[0].mxu0
  %278 = vmatprep.mubr.bf16.mxu0 0
  %279 = vmatmul.mubr.bf16.gmra.mrb[0].mxu0 %v161
  %v280 = vpop.f32.mrb[0].mxu0
  %v281 = vadd.f32 %v189, %v280
  %v282 = vpop.f32.mrb[0].mxu0
  %v283 = vpop.f32.mrb[0].mxu0
  %v284 = vadd.f32 %v189, %v283
  %v285 = vpop.f32.mrb[0].mxu0
  %286 = vdwg.mxu0
  %v287 = vmax.f32 %v225, 0.0
  %v288 = vmax.f32 %v228, 0.0
  %v289 = vmax.f32 %v233, 0.0
  %v290 = vmax.f32 %v236, 0.0
  %v291 = vmax.f32 %v241, 0.0
  %v292 = vmax.f32 %v244, 0.0
  %v293 = vmax.f32 %v249, 0.0
  %v294 = vmax.f32 %v252, 0.0
  %v295 = vmax.f32 %v257, 0.0
  %v296 = vmax.f32 %v260, 0.0
  %v297 = vmax.f32 %v265, 0.0
  %v298 = vmax.f32 %v268, 0.0
  %v299 = vmax.f32 %v273, 0.0
  %v300 = vmax.f32 %v276, 0.0
  %v301 = vmax.f32 %v281, 0.0
  %v302 = vmax.f32 %v284, 0.0
  %s303 = scalar_lea.vmem %s1, %s27
  %v304 = vld [vmem:[%s303] sm:$0xff]
  %v305 = vld [vmem:[%s303 + $0x8] sm:$0xff]
  %v306 = vld [vmem:[%s303 + $0x10] sm:$0xff]
  %v307 = vld [vmem:[%s303 + $0x18] sm:$0xff]
  %v308 = vld [vmem:[%s303 + $0x20] sm:$0xff]
  %v309 = vld [vmem:[%s303 + $0x28] sm:$0xff]
  %v310 = vld [vmem:[%s303 + $0x30] sm:$0xff]
  %v311 = vld [vmem:[%s303 + $0x38] sm:$0xff]
  %v312 = vld [vmem:[%s303 + $0x40] sm:$0xff]
  %v313 = vld [vmem:[%s303 + $0x48] sm:$0xff]
  %v314 = vld [vmem:[%s303 + $0x50] sm:$0xff]
  %v315 = vld [vmem:[%s303 + $0x58] sm:$0xff]
  %v316 = vld [vmem:[%s303 + $0x60] sm:$0xff]
  %v317 = vld [vmem:[%s303 + $0x68] sm:$0xff]
  %v318 = vld [vmem:[%s303 + $0x70] sm:$0xff]
  %v319 = vld [vmem:[%s303 + $0x78] sm:$0xff]
  %v320 = vlaneseq
  %v321 = vshrl.u32 %v320, 7
  %v322 = vsub.s32 0, %v321
  %v323 = vrot.slane %v28, %v322
  %v324 = vmul.f32 %v304, %v323
  %v325 = vmul.f32 %v305, %v323
  %v326 = vmul.f32 %v306, %v323
  %v327 = vmul.f32 %v307, %v323
  %v328 = vmul.f32 %v308, %v323
  %v329 = vmul.f32 %v309, %v323
  %v330 = vmul.f32 %v310, %v323
  %v331 = vmul.f32 %v311, %v323
  %v332 = vmul.f32 %v312, %v323
  %v333 = vmul.f32 %v313, %v323
  %v334 = vmul.f32 %v314, %v323
  %v335 = vmul.f32 %v315, %v323
  %v336 = vmul.f32 %v316, %v323
  %v337 = vmul.f32 %v317, %v323
  %v338 = vmul.f32 %v318, %v323
  %v339 = vmul.f32 %v319, %v323
  %vm340 = vcmask 261120
  %v341 = vsel %vm340, %v324, 0.0
  %342 = vadd.xlane.f32.xlu0 %v341
  %v343 = vpop.xlane.xlu0 %342
  %v344 = vsel %vm340, %v325, 0.0
  %345 = vadd.xlane.f32.xlu0 %v344
  %v346 = vpop.xlane.xlu0 %345
  %v347 = vsel %vm340, %v326, 0.0
  %348 = vadd.xlane.f32.xlu0 %v347
  %v349 = vpop.xlane.xlu0 %348
  %v350 = vsel %vm340, %v327, 0.0
  %351 = vadd.xlane.f32.xlu0 %v350
  %v352 = vpop.xlane.xlu0 %351
  %v353 = vsel %vm340, %v328, 0.0
  %354 = vadd.xlane.f32.xlu0 %v353
  %v355 = vpop.xlane.xlu0 %354
  %v356 = vsel %vm340, %v329, 0.0
  %357 = vadd.xlane.f32.xlu0 %v356
  %v358 = vpop.xlane.xlu0 %357
  %v359 = vsel %vm340, %v330, 0.0
  %360 = vadd.xlane.f32.xlu0 %v359
  %v361 = vpop.xlane.xlu0 %360
  %v362 = vsel %vm340, %v331, 0.0
  %363 = vadd.xlane.f32.xlu0 %v362
  %v364 = vpop.xlane.xlu0 %363
  %v365 = vsel %vm340, %v332, 0.0
  %366 = vadd.xlane.f32.xlu0 %v365
  %v367 = vpop.xlane.xlu0 %366
  %v368 = vsel %vm340, %v333, 0.0
  %369 = vadd.xlane.f32.xlu0 %v368
  %v370 = vpop.xlane.xlu0 %369
  %v371 = vsel %vm340, %v334, 0.0
  %372 = vadd.xlane.f32.xlu0 %v371
  %v373 = vpop.xlane.xlu0 %372
  %v374 = vsel %vm340, %v335, 0.0
  %375 = vadd.xlane.f32.xlu0 %v374
  %v376 = vpop.xlane.xlu0 %375
  %v377 = vsel %vm340, %v336, 0.0
  %378 = vadd.xlane.f32.xlu0 %v377
  %v379 = vpop.xlane.xlu0 %378
  %v380 = vsel %vm340, %v337, 0.0
  %381 = vadd.xlane.f32.xlu0 %v380
  %v382 = vpop.xlane.xlu0 %381
  %v383 = vsel %vm340, %v338, 0.0
  %384 = vadd.xlane.f32.xlu0 %v383
  %v385 = vpop.xlane.xlu0 %384
  %v386 = vsel %vm340, %v339, 0.0
  %387 = vadd.xlane.f32.xlu0 %v386
  %v388 = vpop.xlane.xlu0 %387
  %v389 = vld [vmem:[%s3] sm:$0x1]
  %v391 = vlaneseq
  %v392 = vshrl.u32 %v391, 7
  %v393 = vsub.s32 0, %v392
  %v394 = vrot.slane %v389, %v393
  %v396 = vadd.f32 %v343, %v394
  %v397 = vadd.f32 %v346, %v394
  %v398 = vadd.f32 %v349, %v394
  %v399 = vadd.f32 %v352, %v394
  %v400 = vadd.f32 %v355, %v394
  %v401 = vadd.f32 %v358, %v394
  %v402 = vadd.f32 %v361, %v394
  %v403 = vadd.f32 %v364, %v394
  %v404 = vadd.f32 %v367, %v394
  %v405 = vadd.f32 %v370, %v394
  %v406 = vadd.f32 %v373, %v394
  %v407 = vadd.f32 %v376, %v394
  %v408 = vadd.f32 %v379, %v394
  %v409 = vadd.f32 %v382, %v394
  %v410 = vadd.f32 %v385, %v394
  %v411 = vadd.f32 %v388, %v394
  %vm412 = vcmp.gt.f32.partialorder %v396, 0.0
  %vm413 = vcmp.gt.f32.partialorder %v397, 0.0
  %vm414 = vcmp.gt.f32.partialorder %v398, 0.0
  %vm415 = vcmp.gt.f32.partialorder %v399, 0.0
  %vm416 = vcmp.gt.f32.partialorder %v400, 0.0
  %vm417 = vcmp.gt.f32.partialorder %v401, 0.0
  %vm418 = vcmp.gt.f32.partialorder %v402, 0.0
  %vm419 = vcmp.gt.f32.partialorder %v403, 0.0
  %vm420 = vcmp.gt.f32.partialorder %v404, 0.0
  %vm421 = vcmp.gt.f32.partialorder %v405, 0.0
  %vm422 = vcmp.gt.f32.partialorder %v406, 0.0
  %vm423 = vcmp.gt.f32.partialorder %v407, 0.0
  %vm424 = vcmp.gt.f32.partialorder %v408, 0.0
  %vm425 = vcmp.gt.f32.partialorder %v409, 0.0
  %vm426 = vcmp.gt.f32.partialorder %v410, 0.0
  %vm427 = vcmp.gt.f32.partialorder %v411, 0.0
  %v428 = vmul.f32 %v396, 0.2
  %v429 = vmul.f32 %v397, 0.2
  %v430 = vmul.f32 %v398, 0.2
  %v431 = vmul.f32 %v399, 0.2
  %v432 = vmul.f32 %v400, 0.2
  %v433 = vmul.f32 %v401, 0.2
  %v434 = vmul.f32 %v402, 0.2
  %v435 = vmul.f32 %v403, 0.2
  %v436 = vmul.f32 %v404, 0.2
  %v437 = vmul.f32 %v405, 0.2
  %v438 = vmul.f32 %v406, 0.2
  %v439 = vmul.f32 %v407, 0.2
  %v440 = vmul.f32 %v408, 0.2
  %v441 = vmul.f32 %v409, 0.2
  %v442 = vmul.f32 %v410, 0.2
  %v443 = vmul.f32 %v411, 0.2
  %v444 = vsel %vm412, %v396, %v428
  %v445 = vsel %vm413, %v397, %v429
  %v446 = vsel %vm414, %v398, %v430
  %v447 = vsel %vm415, %v399, %v431
  %v448 = vsel %vm416, %v400, %v432
  %v449 = vsel %vm417, %v401, %v433
  %v450 = vsel %vm418, %v402, %v434
  %v451 = vsel %vm419, %v403, %v435
  %v452 = vsel %vm420, %v404, %v436
  %v453 = vsel %vm421, %v405, %v437
  %v454 = vsel %vm422, %v406, %v438
  %v455 = vsel %vm423, %v407, %v439
  %v456 = vsel %vm424, %v408, %v440
  %v457 = vsel %vm425, %v409, %v441
  %v458 = vsel %vm426, %v410, %v442
  %v459 = vsel %vm427, %v411, %v443
  %v460 = vsel %vm50, %v444, -1e+30
  %v461 = vsel %vm51, %v445, -1e+30
  %v462 = vsel %vm52, %v446, -1e+30
  %v463 = vsel %vm53, %v447, -1e+30
  %v464 = vsel %vm54, %v448, -1e+30
  %v465 = vsel %vm55, %v449, -1e+30
  %v466 = vsel %vm56, %v450, -1e+30
  %v467 = vsel %vm57, %v451, -1e+30
  %v468 = vsel %vm58, %v452, -1e+30
  %v469 = vsel %vm59, %v453, -1e+30
  %v470 = vsel %vm60, %v454, -1e+30
  %v471 = vsel %vm61, %v455, -1e+30
  %v472 = vsel %vm62, %v456, -1e+30
  %v473 = vsel %vm63, %v457, -1e+30
  %v474 = vsel %vm64, %v458, -1e+30
  %v475 = vsel %vm65, %v459, -1e+30
  %476 = vmax.xlane.f32.xlu0 %v460
  %v477 = vpop.xlane.xlu0 %476
  %478 = vmax.xlane.f32.xlu0 %v461
  %v479 = vpop.xlane.xlu0 %478
  %480 = vmax.xlane.f32.xlu0 %v462
  %v481 = vpop.xlane.xlu0 %480
  %482 = vmax.xlane.f32.xlu0 %v463
  %v483 = vpop.xlane.xlu0 %482
  %484 = vmax.xlane.f32.xlu0 %v464
  %v485 = vpop.xlane.xlu0 %484
  %486 = vmax.xlane.f32.xlu0 %v465
  %v487 = vpop.xlane.xlu0 %486
  %488 = vmax.xlane.f32.xlu0 %v466
  %v489 = vpop.xlane.xlu0 %488
  %490 = vmax.xlane.f32.xlu0 %v467
  %v491 = vpop.xlane.xlu0 %490
  %492 = vmax.xlane.f32.xlu0 %v468
  %v493 = vpop.xlane.xlu0 %492
  %494 = vmax.xlane.f32.xlu0 %v469
  %v495 = vpop.xlane.xlu0 %494
  %496 = vmax.xlane.f32.xlu0 %v470
  %v497 = vpop.xlane.xlu0 %496
  %498 = vmax.xlane.f32.xlu0 %v471
  %v499 = vpop.xlane.xlu0 %498
  %500 = vmax.xlane.f32.xlu0 %v472
  %v501 = vpop.xlane.xlu0 %500
  %502 = vmax.xlane.f32.xlu0 %v473
  %v503 = vpop.xlane.xlu0 %502
  %504 = vmax.xlane.f32.xlu0 %v474
  %v505 = vpop.xlane.xlu0 %504
  %506 = vmax.xlane.f32.xlu0 %v475
  %v507 = vpop.xlane.xlu0 %506
  %v508 = vsub.f32 %v460, %v477
  %v509 = vsub.f32 %v461, %v479
  %v510 = vsub.f32 %v462, %v481
  %v511 = vsub.f32 %v463, %v483
  %v512 = vsub.f32 %v464, %v485
  %v513 = vsub.f32 %v465, %v487
  %v514 = vsub.f32 %v466, %v489
  %v515 = vsub.f32 %v467, %v491
  %v516 = vsub.f32 %v468, %v493
  %v517 = vsub.f32 %v469, %v495
  %v518 = vsub.f32 %v470, %v497
  %v519 = vsub.f32 %v471, %v499
  %v520 = vsub.f32 %v472, %v501
  %v521 = vsub.f32 %v473, %v503
  %v522 = vsub.f32 %v474, %v505
  %v523 = vsub.f32 %v475, %v507
  %v524 = vmul.f32 %v508, 1.442695
  %v525 = vpow.pop %v524
  %v526 = vmul.f32 %v509, 1.442695
  %v527 = vpow.pop %v526
  %v528 = vmul.f32 %v510, 1.442695
  %v529 = vpow.pop %v528
  %v530 = vmul.f32 %v511, 1.442695
  %v531 = vpow.pop %v530
  %v532 = vmul.f32 %v512, 1.442695
  %v533 = vpow.pop %v532
  %v534 = vmul.f32 %v513, 1.442695
  %v535 = vpow.pop %v534
  %v536 = vmul.f32 %v514, 1.442695
  %v537 = vpow.pop %v536
  %v538 = vmul.f32 %v515, 1.442695
  %v539 = vpow.pop %v538
  %v540 = vmul.f32 %v516, 1.442695
  %v541 = vpow.pop %v540
  %v542 = vmul.f32 %v517, 1.442695
  %v543 = vpow.pop %v542
  %v544 = vmul.f32 %v518, 1.442695
  %v545 = vpow.pop %v544
  %v546 = vmul.f32 %v519, 1.442695
  %v547 = vpow.pop %v546
  %v548 = vmul.f32 %v520, 1.442695
  %v549 = vpow.pop %v548
  %v550 = vmul.f32 %v521, 1.442695
  %v551 = vpow.pop %v550
  %v552 = vmul.f32 %v522, 1.442695
  %v553 = vpow.pop %v552
  %v554 = vmul.f32 %v523, 1.442695
  %v555 = vpow.pop %v554
  %v556 = vsel %vm50, %v525, 0.0
  %v557 = vsel %vm51, %v527, 0.0
  %v558 = vsel %vm52, %v529, 0.0
  %v559 = vsel %vm53, %v531, 0.0
  %v560 = vsel %vm54, %v533, 0.0
  %v561 = vsel %vm55, %v535, 0.0
  %v562 = vsel %vm56, %v537, 0.0
  %v563 = vsel %vm57, %v539, 0.0
  %v564 = vsel %vm58, %v541, 0.0
  %v565 = vsel %vm59, %v543, 0.0
  %v566 = vsel %vm60, %v545, 0.0
  %v567 = vsel %vm61, %v547, 0.0
  %v568 = vsel %vm62, %v549, 0.0
  %v569 = vsel %vm63, %v551, 0.0
  %v570 = vsel %vm64, %v553, 0.0
  %v571 = vsel %vm65, %v555, 0.0
  %572 = vadd.xlane.f32.xlu0 %v556
  %v573 = vpop.xlane.xlu0 %572
  %574 = vadd.xlane.f32.xlu0 %v557
  %v575 = vpop.xlane.xlu0 %574
  %576 = vadd.xlane.f32.xlu0 %v558
  %v577 = vpop.xlane.xlu0 %576
  %578 = vadd.xlane.f32.xlu0 %v559
  %v579 = vpop.xlane.xlu0 %578
  %580 = vadd.xlane.f32.xlu0 %v560
  %v581 = vpop.xlane.xlu0 %580
  %582 = vadd.xlane.f32.xlu0 %v561
  %v583 = vpop.xlane.xlu0 %582
  %584 = vadd.xlane.f32.xlu0 %v562
  %v585 = vpop.xlane.xlu0 %584
  %586 = vadd.xlane.f32.xlu0 %v563
  %v587 = vpop.xlane.xlu0 %586
  %588 = vadd.xlane.f32.xlu0 %v564
  %v589 = vpop.xlane.xlu0 %588
  %590 = vadd.xlane.f32.xlu0 %v565
  %v591 = vpop.xlane.xlu0 %590
  %592 = vadd.xlane.f32.xlu0 %v566
  %v593 = vpop.xlane.xlu0 %592
  %594 = vadd.xlane.f32.xlu0 %v567
  %v595 = vpop.xlane.xlu0 %594
  %596 = vadd.xlane.f32.xlu0 %v568
  %v597 = vpop.xlane.xlu0 %596
  %598 = vadd.xlane.f32.xlu0 %v569
  %v599 = vpop.xlane.xlu0 %598
  %600 = vadd.xlane.f32.xlu0 %v570
  %v601 = vpop.xlane.xlu0 %600
  %602 = vadd.xlane.f32.xlu0 %v571
  %v603 = vpop.xlane.xlu0 %602
  %v604 = vrcp.pop %v573
  %v605 = vrcp.pop %v575
  %v606 = vrcp.pop %v577
  %v607 = vrcp.pop %v579
  %v608 = vrcp.pop %v581
  %v609 = vrcp.pop %v583
  %v610 = vrcp.pop %v585
  %v611 = vrcp.pop %v587
  %v612 = vrcp.pop %v589
  %v613 = vrcp.pop %v591
  %v614 = vrcp.pop %v593
  %v615 = vrcp.pop %v595
  %v616 = vrcp.pop %v597
  %v617 = vrcp.pop %v599
  %v618 = vrcp.pop %v601
  %v619 = vrcp.pop %v603
  %v620 = vmul.f32 %v556, %v604
  %v621 = vmul.f32 %v557, %v605
  %v622 = vmul.f32 %v558, %v606
  %v623 = vmul.f32 %v559, %v607
  %v624 = vmul.f32 %v560, %v608
  %v625 = vmul.f32 %v561, %v609
  %v626 = vmul.f32 %v562, %v610
  %v627 = vmul.f32 %v563, %v611
  %v628 = vmul.f32 %v564, %v612
  %v629 = vmul.f32 %v565, %v613
  %v630 = vmul.f32 %v566, %v614
  %v631 = vmul.f32 %v567, %v615
  %v632 = vmul.f32 %v568, %v616
  %v633 = vmul.f32 %v569, %v617
  %v634 = vmul.f32 %v570, %v618
  %v635 = vmul.f32 %v571, %v619
  %v636 = vpack.c.bf16 %v621, %v620
  %v637 = vpack.c.bf16 %v623, %v622
  %v638 = vpack.c.bf16 %v625, %v624
  %v639 = vpack.c.bf16 %v627, %v626
  %v640 = vpack.c.bf16 %v629, %v628
  %v641 = vpack.c.bf16 %v631, %v630
  %v642 = vpack.c.bf16 %v633, %v632
  %v643 = vpack.c.bf16 %v635, %v634
  %v644 = vld [vmem:[%s1] sm:$0xff]
  %v645 = vld [vmem:[%s1 + $0x8] sm:$0xff]
  %v646 = vld [vmem:[%s1 + $0x10] sm:$0xff]
  %v647 = vld [vmem:[%s1 + $0x18] sm:$0xff]
  %v648 = vld [vmem:[%s1 + $0x20] sm:$0xff]
  %v649 = vld [vmem:[%s1 + $0x28] sm:$0xff]
  %v650 = vld [vmem:[%s1 + $0x30] sm:$0xff]
  %v651 = vld [vmem:[%s1 + $0x38] sm:$0xff]
  %v652 = vld [vmem:[%s1 + $0x40] sm:$0xff]
  %v653 = vld [vmem:[%s1 + $0x48] sm:$0xff]
  %v654 = vld [vmem:[%s1 + $0x50] sm:$0xff]
  %v655 = vld [vmem:[%s1 + $0x58] sm:$0xff]
  %v656 = vld [vmem:[%s1 + $0x60] sm:$0xff]
  %v657 = vld [vmem:[%s1 + $0x68] sm:$0xff]
  %v658 = vld [vmem:[%s1 + $0x70] sm:$0xff]
  %v659 = vld [vmem:[%s1 + $0x78] sm:$0xff]
  %v660 = vpack.c.bf16 %v645, %v644
  %v661 = vpack.c.bf16 %v647, %v646
  %v662 = vpack.c.bf16 %v649, %v648
  %v663 = vpack.c.bf16 %v651, %v650
  %v664 = vpack.c.bf16 %v653, %v652
  %v665 = vpack.c.bf16 %v655, %v654
  %v666 = vpack.c.bf16 %v657, %v656
  %v667 = vpack.c.bf16 %v659, %v658
  %v668 = vlaneseq
  %v669 = vshrl.u32 %v668, 7
  %v670 = vsub.s32 0, %v669
  %v671 = vrot.slane %v29, %v670
  %672 = vmatprep.subr.bf16.mxu0 0
  %673 = vmatpush1.bf16.msra.mxu0 %v660
  %674 = vmatprep.subr.bf16.mxu0 0
  %675 = vmatpush1.bf16.msra.mxu0 %v661
  %676 = vmatprep.subr.bf16.mxu0 0
  %677 = vmatpush1.bf16.msra.mxu0 %v662
  %678 = vmatprep.subr.bf16.mxu0 0
  %679 = vmatpush1.bf16.msra.mxu0 %v663
  %680 = vmatprep.subr.bf16.mxu0 0
  %681 = vmatpush1.bf16.msra.mxu0 %v664
  %682 = vmatprep.subr.bf16.mxu0 0
  %683 = vmatpush1.bf16.msra.mxu0 %v665
  %684 = vmatprep.subr.bf16.mxu0 0
  %685 = vmatpush1.bf16.msra.mxu0 %v666
  %686 = vmatprep.subr.bf16.mxu0 0
  %687 = vmatpush1.bf16.msra.mxu0 %v667
  %688 = vmatprep.subr.bf16.mxu0 0
  %689 = vmatpush1.bf16.msra.mxu0 0
  %690 = vmatprep.subr.bf16.mxu0 0
  %691 = vmatpush1.bf16.msra.mxu0 0
  %692 = vmatprep.subr.bf16.mxu0 0
  %693 = vmatpush1.bf16.msra.mxu0 0
  %694 = vmatprep.subr.bf16.mxu0 0
  %695 = vmatpush1.bf16.msra.mxu0 0
  %696 = vmatprep.subr.bf16.mxu0 0
  %697 = vmatpush1.bf16.msra.mxu0 0
  %698 = vmatprep.subr.bf16.mxu0 0
  %699 = vmatpush1.bf16.msra.mxu0 0
  %700 = vmatprep.subr.bf16.mxu0 0
  %701 = vmatpush1.bf16.msra.mxu0 0
  %702 = vmatprep.subr.bf16.mxu0 0
  %703 = vmatpush1.bf16.msra.mxu0 0
  %704 = vmatprep.mubr.bf16.mxu0 0
  %705 = vmatmul.mubr.bf16.gmra.mrb[0].mxu0 %v636
  %v706 = vpop.f32.mrb[0].mxu0
  %v707 = vadd.f32 %v671, %v706
  %v708 = vpop.f32.mrb[0].mxu0
  %v709 = vpop.f32.mrb[0].mxu0
  %v710 = vadd.f32 %v671, %v709
  %v711 = vpop.f32.mrb[0].mxu0
  %712 = vmatprep.mubr.bf16.mxu0 0
  %713 = vmatmul.mubr.bf16.gmra.mrb[0].mxu0 %v637
  %v714 = vpop.f32.mrb[0].mxu0
  %v715 = vadd.f32 %v671, %v714
  %v716 = vpop.f32.mrb[0].mxu0
  %v717 = vpop.f32.mrb[0].mxu0
  %v718 = vadd.f32 %v671, %v717
  %v719 = vpop.f32.mrb[0].mxu0
  %720 = vmatprep.mubr.bf16.mxu0 0
  %721 = vmatmul.mubr.bf16.gmra.mrb[0].mxu0 %v638
  %v722 = vpop.f32.mrb[0].mxu0
  %v723 = vadd.f32 %v671, %v722
  %v724 = vpop.f32.mrb[0].mxu0
  %v725 = vpop.f32.mrb[0].mxu0
  %v726 = vadd.f32 %v671, %v725
  %v727 = vpop.f32.mrb[0].mxu0
  %728 = vmatprep.mubr.bf16.mxu0 0
  %729 = vmatmul.mubr.bf16.gmra.mrb[0].mxu0 %v639
  %v730 = vpop.f32.mrb[0].mxu0
  %v731 = vadd.f32 %v671, %v730
  %v732 = vpop.f32.mrb[0].mxu0
  %v733 = vpop.f32.mrb[0].mxu0
  %v734 = vadd.f32 %v671, %v733
  %v735 = vpop.f32.mrb[0].mxu0
  %736 = vmatprep.mubr.bf16.mxu0 0
  %737 = vmatmul.mubr.bf16.gmra.mrb[0].mxu0 %v640
  %v738 = vpop.f32.mrb[0].mxu0
  %v739 = vadd.f32 %v671, %v738
  %v740 = vpop.f32.mrb[0].mxu0
  %v741 = vpop.f32.mrb[0].mxu0
  %v742 = vadd.f32 %v671, %v741
  %v743 = vpop.f32.mrb[0].mxu0
  %744 = vmatprep.mubr.bf16.mxu0 0
  %745 = vmatmul.mubr.bf16.gmra.mrb[0].mxu0 %v641
  %v746 = vpop.f32.mrb[0].mxu0
  %v747 = vadd.f32 %v671, %v746
  %v748 = vpop.f32.mrb[0].mxu0
  %v749 = vpop.f32.mrb[0].mxu0
  %v750 = vadd.f32 %v671, %v749
  %v751 = vpop.f32.mrb[0].mxu0
  %752 = vmatprep.mubr.bf16.mxu0 0
  %753 = vmatmul.mubr.bf16.gmra.mrb[0].mxu0 %v642
  %v754 = vpop.f32.mrb[0].mxu0
  %v755 = vadd.f32 %v671, %v754
  %v756 = vpop.f32.mrb[0].mxu0
  %v757 = vpop.f32.mrb[0].mxu0
  %v758 = vadd.f32 %v671, %v757
  %v759 = vpop.f32.mrb[0].mxu0
  %760 = vmatprep.mubr.bf16.mxu0 0
  %761 = vmatmul.mubr.bf16.gmra.mrb[0].mxu0 %v643
  %v762 = vpop.f32.mrb[0].mxu0
  %v763 = vadd.f32 %v671, %v762
  %v764 = vpop.f32.mrb[0].mxu0
  %v765 = vpop.f32.mrb[0].mxu0
  %v766 = vadd.f32 %v671, %v765
  %v767 = vpop.f32.mrb[0].mxu0
  %768 = vdwg.mxu0
  %vm769 = vcmp.gt.f32.partialorder %v707, 0.0
  %vm770 = vcmp.gt.f32.partialorder %v710, 0.0
  %vm771 = vcmp.gt.f32.partialorder %v715, 0.0
  %vm772 = vcmp.gt.f32.partialorder %v718, 0.0
  %vm773 = vcmp.gt.f32.partialorder %v723, 0.0
  %vm774 = vcmp.gt.f32.partialorder %v726, 0.0
  %vm775 = vcmp.gt.f32.partialorder %v731, 0.0
  %vm776 = vcmp.gt.f32.partialorder %v734, 0.0
  %vm777 = vcmp.gt.f32.partialorder %v739, 0.0
  %vm778 = vcmp.gt.f32.partialorder %v742, 0.0
  %vm779 = vcmp.gt.f32.partialorder %v747, 0.0
  %vm780 = vcmp.gt.f32.partialorder %v750, 0.0
  %vm781 = vcmp.gt.f32.partialorder %v755, 0.0
  %vm782 = vcmp.gt.f32.partialorder %v758, 0.0
  %vm783 = vcmp.gt.f32.partialorder %v763, 0.0
  %vm784 = vcmp.gt.f32.partialorder %v766, 0.0
  %v785 = vmin.f32 %v707, 0.0
  %v786 = vmin.f32 %v710, 0.0
  %v787 = vmin.f32 %v715, 0.0
  %v788 = vmin.f32 %v718, 0.0
  %v789 = vmin.f32 %v723, 0.0
  %v790 = vmin.f32 %v726, 0.0
  %v791 = vmin.f32 %v731, 0.0
  %v792 = vmin.f32 %v734, 0.0
  %v793 = vmin.f32 %v739, 0.0
  %v794 = vmin.f32 %v742, 0.0
  %v795 = vmin.f32 %v747, 0.0
  %v796 = vmin.f32 %v750, 0.0
  %v797 = vmin.f32 %v755, 0.0
  %v798 = vmin.f32 %v758, 0.0
  %v799 = vmin.f32 %v763, 0.0
  %v800 = vmin.f32 %v766, 0.0
  %v801 = vmul.f32 %v785, 1.442695
  %v802 = vpow.pop %v801
  %v803 = vmul.f32 %v786, 1.442695
  %v804 = vpow.pop %v803
  %v805 = vmul.f32 %v787, 1.442695
  %v806 = vpow.pop %v805
  %v807 = vmul.f32 %v788, 1.442695
  %v808 = vpow.pop %v807
  %v809 = vmul.f32 %v789, 1.442695
  %v810 = vpow.pop %v809
  %v811 = vmul.f32 %v790, 1.442695
  %v812 = vpow.pop %v811
  %v813 = vmul.f32 %v791, 1.442695
  %v814 = vpow.pop %v813
  %v815 = vmul.f32 %v792, 1.442695
  %v816 = vpow.pop %v815
  %v817 = vmul.f32 %v793, 1.442695
  %v818 = vpow.pop %v817
  %v819 = vmul.f32 %v794, 1.442695
  %v820 = vpow.pop %v819
  %v821 = vmul.f32 %v795, 1.442695
  %v822 = vpow.pop %v821
  %v823 = vmul.f32 %v796, 1.442695
  %v824 = vpow.pop %v823
  %v825 = vmul.f32 %v797, 1.442695
  %v826 = vpow.pop %v825
  %v827 = vmul.f32 %v798, 1.442695
  %v828 = vpow.pop %v827
  %v829 = vmul.f32 %v799, 1.442695
  %v830 = vpow.pop %v829
  %v831 = vmul.f32 %v800, 1.442695
  %v832 = vpow.pop %v831
  %v833 = vsub.f32 %v802, 1.0
  %v834 = vsub.f32 %v804, 1.0
  %v835 = vsub.f32 %v806, 1.0
  %v836 = vsub.f32 %v808, 1.0
  %v837 = vsub.f32 %v810, 1.0
  %v838 = vsub.f32 %v812, 1.0
  %v839 = vsub.f32 %v814, 1.0
  %v840 = vsub.f32 %v816, 1.0
  %v841 = vsub.f32 %v818, 1.0
  %v842 = vsub.f32 %v820, 1.0
  %v843 = vsub.f32 %v822, 1.0
  %v844 = vsub.f32 %v824, 1.0
  %v845 = vsub.f32 %v826, 1.0
  %v846 = vsub.f32 %v828, 1.0
  %v847 = vsub.f32 %v830, 1.0
  %v848 = vsub.f32 %v832, 1.0
  %v849 = vsel %vm769, %v707, %v833
  %v850 = vsel %vm770, %v710, %v834
  %v851 = vsel %vm771, %v715, %v835
  %v852 = vsel %vm772, %v718, %v836
  %v853 = vsel %vm773, %v723, %v837
  %v854 = vsel %vm774, %v726, %v838
  %v855 = vsel %vm775, %v731, %v839
  %v856 = vsel %vm776, %v734, %v840
  %v857 = vsel %vm777, %v739, %v841
  %v858 = vsel %vm778, %v742, %v842
  %v859 = vsel %vm779, %v747, %v843
  %v860 = vsel %vm780, %v750, %v844
  %v861 = vsel %vm781, %v755, %v845
  %v862 = vsel %vm782, %v758, %v846
  %v863 = vsel %vm783, %v763, %v847
  %v864 = vsel %vm784, %v766, %v848
  %881 = vrot.lane.b32.xlu0 %v287, 32
  %v882 = vpop.permute.xlu0 %881
  %883 = vrot.lane.b32.xlu0 %v288, 32
  %v884 = vpop.permute.xlu0 %883
  %885 = vrot.lane.b32.xlu0 %v289, 32
  %v886 = vpop.permute.xlu0 %885
  %887 = vrot.lane.b32.xlu0 %v290, 32
  %v888 = vpop.permute.xlu0 %887
  %889 = vrot.lane.b32.xlu0 %v291, 32
  %v890 = vpop.permute.xlu0 %889
  %891 = vrot.lane.b32.xlu0 %v292, 32
  %v892 = vpop.permute.xlu0 %891
  %893 = vrot.lane.b32.xlu0 %v293, 32
  %v894 = vpop.permute.xlu0 %893
  %895 = vrot.lane.b32.xlu0 %v294, 32
  %v896 = vpop.permute.xlu0 %895
  %897 = vrot.lane.b32.xlu0 %v295, 32
  %v898 = vpop.permute.xlu0 %897
  %899 = vrot.lane.b32.xlu0 %v296, 32
  %v900 = vpop.permute.xlu0 %899
  %901 = vrot.lane.b32.xlu0 %v297, 32
  %v902 = vpop.permute.xlu0 %901
  %903 = vrot.lane.b32.xlu0 %v298, 32
  %v904 = vpop.permute.xlu0 %903
  %905 = vrot.lane.b32.xlu0 %v299, 32
  %v906 = vpop.permute.xlu0 %905
  %907 = vrot.lane.b32.xlu0 %v300, 32
  %v908 = vpop.permute.xlu0 %907
  %909 = vrot.lane.b32.xlu0 %v301, 32
  %v910 = vpop.permute.xlu0 %909
  %911 = vrot.lane.b32.xlu0 %v302, 32
  %v912 = vpop.permute.xlu0 %911
  %v929 = vsel %vm340, %v849, %v882
  %v930 = vsel %vm340, %v850, %v884
  %v931 = vsel %vm340, %v851, %v886
  %v932 = vsel %vm340, %v852, %v888
  %v933 = vsel %vm340, %v853, %v890
  %v934 = vsel %vm340, %v854, %v892
  %v935 = vsel %vm340, %v855, %v894
  %v936 = vsel %vm340, %v856, %v896
  %v937 = vsel %vm340, %v857, %v898
  %v938 = vsel %vm340, %v858, %v900
  %v939 = vsel %vm340, %v859, %v902
  %v940 = vsel %vm340, %v860, %v904
  %v941 = vsel %vm340, %v861, %v906
  %v942 = vsel %vm340, %v862, %v908
  %v943 = vsel %vm340, %v863, %v910
  %v944 = vsel %vm340, %v864, %v912
  %v945 = vld [vmem:[%s6] sm:$0xff]
  %v946 = vld [vmem:[%s6 + $0x8] sm:$0xff]
  %v947 = vld [vmem:[%s6 + $0x10] sm:$0xff]
  %v948 = vld [vmem:[%s6 + $0x18] sm:$0xff]
  %v949 = vld [vmem:[%s6 + $0x20] sm:$0xff]
  %v950 = vld [vmem:[%s6 + $0x28] sm:$0xff]
  %v951 = vld [vmem:[%s6 + $0x30] sm:$0xff]
  %v952 = vld [vmem:[%s6 + $0x38] sm:$0xff]
  %v953 = vlaneseq
  %v954 = vshrl.u32 %v953, 7
  %v955 = vsub.s32 0, %v954
  %v956 = vrot.slane %v31, %v955
  %vm957 = vcmask 523264
  %v959 = vsel %vm957, %v929, 0
  %v962 = vsel %vm957, %v930, 0
  %v965 = vsel %vm957, %v931, 0
  %v968 = vsel %vm957, %v932, 0
  %v971 = vsel %vm957, %v933, 0
  %v974 = vsel %vm957, %v934, 0
  %v977 = vsel %vm957, %v935, 0
  %v980 = vsel %vm957, %v936, 0
  %v983 = vsel %vm957, %v937, 0
  %v986 = vsel %vm957, %v938, 0
  %v989 = vsel %vm957, %v939, 0
  %v992 = vsel %vm957, %v940, 0
  %v995 = vsel %vm957, %v941, 0
  %v998 = vsel %vm957, %v942, 0
  %v1001 = vsel %vm957, %v943, 0
  %v1004 = vsel %vm957, %v944, 0
  %1006 = vmatprep.subr.mxu0 0.0
  %1007 = vmatpush1.msra.mxu0 %v945
  %1008 = vmatprep.subr.mxu0 0.0
  %1009 = vmatpush1.msra.mxu0 %v946
  %1010 = vmatprep.subr.mxu0 0.0
  %1011 = vmatpush1.msra.mxu0 %v947
  %1012 = vmatprep.subr.mxu0 0.0
  %1013 = vmatpush1.msra.mxu0 %v948
  %1014 = vmatprep.subr.mxu0 0.0
  %1015 = vmatpush1.msra.mxu0 %v949
  %1016 = vmatprep.subr.mxu0 0.0
  %1017 = vmatpush1.msra.mxu0 %v950
  %1018 = vmatprep.subr.mxu0 0.0
  %1019 = vmatpush1.msra.mxu0 %v951
  %1020 = vmatprep.subr.mxu0 0.0
  %1021 = vmatpush1.msra.mxu0 %v952
  %1022 = vmatprep.subr.mxu0 0.0
  %1023 = vmatpush1.msra.mxu0 0.0
  %1024 = vmatprep.subr.mxu0 0.0
  %1025 = vmatpush1.msra.mxu0 0.0
  %1026 = vmatprep.subr.mxu0 0.0
  %1027 = vmatpush1.msra.mxu0 0.0
  %1028 = vmatprep.subr.mxu0 0.0
  %1029 = vmatpush1.msra.mxu0 0.0
  %1030 = vmatprep.subr.mxu0 0.0
  %1031 = vmatpush1.msra.mxu0 0.0
  %1032 = vmatprep.subr.mxu0 0.0
  %1033 = vmatpush1.msra.mxu0 0.0
  %1034 = vmatprep.subr.mxu0 0.0
  %1035 = vmatpush1.msra.mxu0 0.0
  %1036 = vmatprep.subr.mxu0 0.0
  %1037 = vmatpush1.msra.mxu0 0.0
  %1038 = vmatprep.subr.mxu0 0.0
  %1039 = vmatpush1.msra.mxu0 0.0
  %1040 = vmatprep.subr.mxu0 0.0
  %1041 = vmatpush1.msra.mxu0 0.0
  %1042 = vmatprep.subr.mxu0 0.0
  %1043 = vmatpush1.msra.mxu0 0.0
  %1044 = vmatprep.subr.mxu0 0.0
  %1045 = vmatpush1.msra.mxu0 0.0
  %1046 = vmatprep.subr.mxu0 0.0
  %1047 = vmatpush1.msra.mxu0 0.0
  %1048 = vmatprep.subr.mxu0 0.0
  %1049 = vmatpush1.msra.mxu0 0.0
  %1050 = vmatprep.subr.mxu0 0.0
  %1051 = vmatpush1.msra.mxu0 0.0
  %1052 = vmatprep.subr.mxu0 0.0
  %1053 = vmatpush1.msra.mxu0 0.0
  %1054 = vmatprep.subr.mxu0 0.0
  %1055 = vmatpush1.msra.mxu0 0.0
  %1056 = vmatprep.subr.mxu0 0.0
  %1057 = vmatpush1.msra.mxu0 0.0
  %1058 = vmatprep.subr.mxu0 0.0
  %1059 = vmatpush1.msra.mxu0 0.0
  %1060 = vmatprep.subr.mxu0 0.0
  %1061 = vmatpush1.msra.mxu0 0.0
  %1062 = vmatprep.subr.mxu0 0.0
  %1063 = vmatpush1.msra.mxu0 0.0
  %1064 = vmatprep.subr.mxu0 0.0
  %1065 = vmatpush1.msra.mxu0 0.0
  %1066 = vmatprep.subr.mxu0 0.0
  %1067 = vmatpush1.msra.mxu0 0.0
  %1068 = vmatprep.subr.mxu0 0.0
  %1069 = vmatpush1.msra.mxu0 0.0
  %1070 = vmatprep.mubr.f32.mxu0 0.0
  %1071 = vmatmul.mubr.f32.gmra.mrb[0].mxu0 %v959
  %v1072 = vpop.f32.mrb[0].mxu0
  %v1073 = vadd.f32 %v956, %v1072
  %v1074 = vpop.f32.mrb[0].mxu0
  %1075 = vmatprep.mubr.f32.mxu0 0.0
  %1076 = vmatmul.mubr.f32.gmra.mrb[0].mxu0 %v962
  %v1077 = vpop.f32.mrb[0].mxu0
  %v1078 = vadd.f32 %v956, %v1077
  %v1079 = vpop.f32.mrb[0].mxu0
  %1080 = vmatprep.mubr.f32.mxu0 0.0
  %1081 = vmatmul.mubr.f32.gmra.mrb[0].mxu0 %v965
  %v1082 = vpop.f32.mrb[0].mxu0
  %v1083 = vadd.f32 %v956, %v1082
  %v1084 = vpop.f32.mrb[0].mxu0
  %1085 = vmatprep.mubr.f32.mxu0 0.0
  %1086 = vmatmul.mubr.f32.gmra.mrb[0].mxu0 %v968
  %v1087 = vpop.f32.mrb[0].mxu0
  %v1088 = vadd.f32 %v956, %v1087
  %v1089 = vpop.f32.mrb[0].mxu0
  %1090 = vmatprep.mubr.f32.mxu0 0.0
  %1091 = vmatmul.mubr.f32.gmra.mrb[0].mxu0 %v971
  %v1092 = vpop.f32.mrb[0].mxu0
  %v1093 = vadd.f32 %v956, %v1092
  %v1094 = vpop.f32.mrb[0].mxu0
  %1095 = vmatprep.mubr.f32.mxu0 0.0
  %1096 = vmatmul.mubr.f32.gmra.mrb[0].mxu0 %v974
  %v1097 = vpop.f32.mrb[0].mxu0
  %v1098 = vadd.f32 %v956, %v1097
  %v1099 = vpop.f32.mrb[0].mxu0
  %1100 = vmatprep.mubr.f32.mxu0 0.0
  %1101 = vmatmul.mubr.f32.gmra.mrb[0].mxu0 %v977
  %v1102 = vpop.f32.mrb[0].mxu0
  %v1103 = vadd.f32 %v956, %v1102
  %v1104 = vpop.f32.mrb[0].mxu0
  %1105 = vmatprep.mubr.f32.mxu0 0.0
  %1106 = vmatmul.mubr.f32.gmra.mrb[0].mxu0 %v980
  %v1107 = vpop.f32.mrb[0].mxu0
  %v1108 = vadd.f32 %v956, %v1107
  %v1109 = vpop.f32.mrb[0].mxu0
  %1110 = vmatprep.mubr.f32.mxu0 0.0
  %1111 = vmatmul.mubr.f32.gmra.mrb[0].mxu0 %v983
  %v1112 = vpop.f32.mrb[0].mxu0
  %v1113 = vadd.f32 %v956, %v1112
  %v1114 = vpop.f32.mrb[0].mxu0
  %1115 = vmatprep.mubr.f32.mxu0 0.0
  %1116 = vmatmul.mubr.f32.gmra.mrb[0].mxu0 %v986
  %v1117 = vpop.f32.mrb[0].mxu0
  %v1118 = vadd.f32 %v956, %v1117
  %v1119 = vpop.f32.mrb[0].mxu0
  %1120 = vmatprep.mubr.f32.mxu0 0.0
  %1121 = vmatmul.mubr.f32.gmra.mrb[0].mxu0 %v989
  %v1122 = vpop.f32.mrb[0].mxu0
  %v1123 = vadd.f32 %v956, %v1122
  %v1124 = vpop.f32.mrb[0].mxu0
  %1125 = vmatprep.mubr.f32.mxu0 0.0
  %1126 = vmatmul.mubr.f32.gmra.mrb[0].mxu0 %v992
  %v1127 = vpop.f32.mrb[0].mxu0
  %v1128 = vadd.f32 %v956, %v1127
  %v1129 = vpop.f32.mrb[0].mxu0
  %1130 = vmatprep.mubr.f32.mxu0 0.0
  %1131 = vmatmul.mubr.f32.gmra.mrb[0].mxu0 %v995
  %v1132 = vpop.f32.mrb[0].mxu0
  %v1133 = vadd.f32 %v956, %v1132
  %v1134 = vpop.f32.mrb[0].mxu0
  %1135 = vmatprep.mubr.f32.mxu0 0.0
  %1136 = vmatmul.mubr.f32.gmra.mrb[0].mxu0 %v998
  %v1137 = vpop.f32.mrb[0].mxu0
  %v1138 = vadd.f32 %v956, %v1137
  %v1139 = vpop.f32.mrb[0].mxu0
  %1140 = vmatprep.mubr.f32.mxu0 0.0
  %1141 = vmatmul.mubr.f32.gmra.mrb[0].mxu0 %v1001
  %v1142 = vpop.f32.mrb[0].mxu0
  %v1143 = vadd.f32 %v956, %v1142
  %v1144 = vpop.f32.mrb[0].mxu0
  %1145 = vmatprep.mubr.f32.mxu0 0.0
  %1146 = vmatmul.mubr.f32.gmra.mrb[0].mxu0 %v1004
  %v1147 = vpop.f32.mrb[0].mxu0
  %v1148 = vadd.f32 %v956, %v1147
  %v1149 = vpop.f32.mrb[0].mxu0
  %1150 = vdwg.mxu0
  %v1151 = vmax.f32 %v1073, 0.0
  %v1152 = vmax.f32 %v1078, 0.0
  %v1153 = vmax.f32 %v1083, 0.0
  %v1154 = vmax.f32 %v1088, 0.0
  %v1155 = vmax.f32 %v1093, 0.0
  %v1156 = vmax.f32 %v1098, 0.0
  %v1157 = vmax.f32 %v1103, 0.0
  %v1158 = vmax.f32 %v1108, 0.0
  %v1159 = vmax.f32 %v1113, 0.0
  %v1160 = vmax.f32 %v1118, 0.0
  %v1161 = vmax.f32 %v1123, 0.0
  %v1162 = vmax.f32 %v1128, 0.0
  %v1163 = vmax.f32 %v1133, 0.0
  %v1164 = vmax.f32 %v1138, 0.0
  %v1165 = vmax.f32 %v1143, 0.0
  %v1166 = vmax.f32 %v1148, 0.0
  %1168 = vset.pattern.permute.xlu0 0
  %1169 = vperm.xlu0 %1168, %v33
  %v1170 = vpop.permute.xlu0 %1169
  %v1173 = vsel %vm340, %v32, 0
  %v1176 = vsel %vm340, %v1151, 0
  %v1179 = vsel %vm340, %v1152, 0
  %v1182 = vsel %vm340, %v1153, 0
  %v1185 = vsel %vm340, %v1154, 0
  %v1188 = vsel %vm340, %v1155, 0
  %v1191 = vsel %vm340, %v1156, 0
  %v1194 = vsel %vm340, %v1157, 0
  %v1197 = vsel %vm340, %v1158, 0
  %v1200 = vsel %vm340, %v1159, 0
  %v1203 = vsel %vm340, %v1160, 0
  %v1206 = vsel %vm340, %v1161, 0
  %v1209 = vsel %vm340, %v1162, 0
  %v1212 = vsel %vm340, %v1163, 0
  %v1215 = vsel %vm340, %v1164, 0
  %v1218 = vsel %vm340, %v1165, 0
  %v1221 = vsel %vm340, %v1166, 0
  %1223 = vmatprep.subr.mxu0 0.0
  %1224 = vmatpush1.xpose.msra.mxu0 %v1176
  %1225 = vmatprep.subr.mxu0 0.0
  %1226 = vmatpush1.xpose.msra.mxu0 %v1179
  %1227 = vmatprep.subr.mxu0 0.0
  %1228 = vmatpush1.xpose.msra.mxu0 %v1182
  %1229 = vmatprep.subr.mxu0 0.0
  %1230 = vmatpush1.xpose.msra.mxu0 %v1185
  %1231 = vmatprep.subr.mxu0 0.0
  %1232 = vmatpush1.xpose.msra.mxu0 %v1188
  %1233 = vmatprep.subr.mxu0 0.0
  %1234 = vmatpush1.xpose.msra.mxu0 %v1191
  %1235 = vmatprep.subr.mxu0 0.0
  %1236 = vmatpush1.xpose.msra.mxu0 %v1194
  %1237 = vmatprep.subr.mxu0 0.0
  %1238 = vmatpush1.xpose.msra.mxu0 %v1197
  %1239 = vmatprep.subr.mxu0 0.0
  %1240 = vmatpush1.xpose.msra.mxu0 %v1200
  %1241 = vmatprep.subr.mxu0 0.0
  %1242 = vmatpush1.xpose.msra.mxu0 %v1203
  %1243 = vmatprep.subr.mxu0 0.0
  %1244 = vmatpush1.xpose.msra.mxu0 %v1206
  %1245 = vmatprep.subr.mxu0 0.0
  %1246 = vmatpush1.xpose.msra.mxu0 %v1209
  %1247 = vmatprep.subr.mxu0 0.0
  %1248 = vmatpush1.xpose.msra.mxu0 %v1212
  %1249 = vmatprep.subr.mxu0 0.0
  %1250 = vmatpush1.xpose.msra.mxu0 %v1215
  %1251 = vmatprep.subr.mxu0 0.0
  %1252 = vmatpush1.xpose.msra.mxu0 %v1218
  %1253 = vmatprep.subr.mxu0 0.0
  %1254 = vmatpush1.xpose.msra.mxu0 %v1221
  %1255 = vmatprep.subr.mxu0 0.0
  %1256 = vmatpush1.xpose.msra.mxu0 0.0
  %1257 = vmatprep.subr.mxu0 0.0
  %1258 = vmatpush1.xpose.msra.mxu0 0.0
  %1259 = vmatprep.subr.mxu0 0.0
  %1260 = vmatpush1.xpose.msra.mxu0 0.0
  %1261 = vmatprep.subr.mxu0 0.0
  %1262 = vmatpush1.xpose.msra.mxu0 0.0
  %1263 = vmatprep.subr.mxu0 0.0
  %1264 = vmatpush1.xpose.msra.mxu0 0.0
  %1265 = vmatprep.subr.mxu0 0.0
  %1266 = vmatpush1.xpose.msra.mxu0 0.0
  %1267 = vmatprep.subr.mxu0 0.0
  %1268 = vmatpush1.xpose.msra.mxu0 0.0
  %1269 = vmatprep.subr.mxu0 0.0
  %1270 = vmatpush1.xpose.msra.mxu0 0.0
  %1271 = vmatprep.subr.mxu0 0.0
  %1272 = vmatpush1.xpose.msra.mxu0 0.0
  %1273 = vmatprep.subr.mxu0 0.0
  %1274 = vmatpush1.xpose.msra.mxu0 0.0
  %1275 = vmatprep.subr.mxu0 0.0
  %1276 = vmatpush1.xpose.msra.mxu0 0.0
  %1277 = vmatprep.subr.mxu0 0.0
  %1278 = vmatpush1.xpose.msra.mxu0 0.0
  %1279 = vmatprep.subr.mxu0 0.0
  %1280 = vmatpush1.xpose.msra.mxu0 0.0
  %1281 = vmatprep.subr.mxu0 0.0
  %1282 = vmatpush1.xpose.msra.mxu0 0.0
  %1283 = vmatprep.subr.mxu0 0.0
  %1284 = vmatpush1.xpose.msra.mxu0 0.0
  %1285 = vmatprep.subr.mxu0 0.0
  %1286 = vmatpush1.xpose.msra.mxu0 0.0
  %1287 = vmatprep.mubr.f32.mxu0 0.0
  %1288 = vmatmul.mubr.f32.gmra.mrb[0].mxu0 %v1173
  %v1289 = vpop.f32.mrb[0].mxu0
  %v1290 = vadd.f32 %v1170, %v1289
  %v1291 = vpop.f32.mrb[0].mxu0
  %1292 = vdwg.mxu0
  %1293 = vst [vmem:[%s7] sm:$0x1] %v1290
  // Predicated region
  $region30: #{dual_branch_gnn_forward.3} parent=0 // pred_check
    _
  $region31: #{dual_branch_gnn_forward.3} parent=0 // pred_check_branch
    %1295 = sbr.rel (0) target = $region33
  $region32: #{dual_branch_gnn_forward.3} parent=0 // pred_region
    _
  $region33: #{dual_branch_gnn_forward.3} parent=0 // pred_fallthru
    _
  // Predicated region
  $region34: #{dual_branch_gnn_forward.3} parent=0 // pred_check
    _
  $region35: #{dual_branch_gnn_forward.3} parent=0 // pred_check_branch
    %1297 = sbr.rel (0) target = $region37
  $region36: #{dual_branch_gnn_forward.3} parent=0 // pred_region
    _
  $region37: #{dual_branch_gnn_forward.3} parent=0 // pred_fallthru
    _

</llo_original>
